<compile_context>
chip_gen: v5e
topology: v5e:2x2
jax: 0.10.0
libtpu: 0.0.40
codegen_flags: <defaults>
</compile_context>

<pallas_src>
import jax
import jax.numpy as jnp
from jax.experimental import pallas as pl
from jax.experimental.pallas import tpu as pltpu


def _round_up(x: int, m: int) -> int:
    return ((x + m - 1) // m) * m


def _choose_graphs_per_step(n_pad: int, target_rows: int = 256) -> int:
    """G graphs per grid step so M = G*n_pad fills MXU rows (multiple of 8)."""
    g = max(1, target_rows // n_pad)
    if g > 1:
        g = max(8, (g // 8) * 8)
    return g


def make_graph_ebd_kernel(max_lv: int, n_real: int, n_pad: int,
                          graphs_per_step: int, out_pad: int):
    """Kernel over one super-block of `graphs_per_step` graphs."""

    def kernel(feat_ref, adj_ref,
               wn_ref, bn_ref, wc_ref, bc_ref, wo_ref, bo_ref,
               out_ref):
        feat = feat_ref[0]          # (G*n_pad, feat_dim) bf16
        adj = adj_ref[0]            # (G*n_pad, G*n_pad)  bf16 block-diagonal

        # ---- input message: Linear(feat -> latent), bf16 x bf16 -> f32 acc ----
        msg = jnp.dot(feat, wn_ref[...],
                      preferred_element_type=jnp.float32) + bn_ref[...]
        # hoist bias+msg out of the unrolled loop (JAX does not CSE it)
        bias_msg = msg + bc_ref[...]                       # f32, stays live
        h = jnp.maximum(msg, 0.0).astype(jnp.bfloat16)     # one cast per level

        wc = wc_ref[...]                                   # (lat_pad, lat_pad) bf16
        # ---- mean-field message passing (unrolled, static max_lv) ----
        for _ in range(max_lv):
            # adjacency is 0/1 -> exact in bf16; accumulate in f32 on the MXU.
            pooled = jnp.dot(adj, h,
                             preferred_element_type=jnp.float32
                             ).astype(jnp.bfloat16)        # consumed immediately
            h = jnp.maximum(
                jnp.dot(pooled, wc, preferred_element_type=jnp.float32)
                + bias_msg,
                0.0).astype(jnp.bfloat16)

        # ---- output projection: Linear(latent -> out) + relu ----
        node_out = jnp.maximum(
            jnp.dot(h, wo_ref[...], preferred_element_type=jnp.float32)
            + bo_ref[...],
            0.0)                                           # (G*n_pad, out_pad) f32

        # ---- per-graph pooling: sum over each graph's nodes (XLU reduce) ----
        node_out = node_out.reshape(graphs_per_step, n_pad, out_pad)
        if n_pad > n_real:
            # Mask padded node rows (their bias-driven activations must not pool).
            row_ids = jax.lax.broadcasted_iota(jnp.int32, (1, n_pad, 1), 1)
            node_out = jnp.where(row_ids < n_real, node_out, 0.0)
        # node_out >= 0 already, so the original outer relu is a no-op.
        out_ref[...] = jnp.sum(node_out, axis=1)           # (G, out_pad)

    return kernel


def graph_ebd_forward(feat_b, adj_b, params, max_lv=3):
    """Fused s2v mean-field forward over a batch of equal-sized graphs.

    feat_b: [B, n_g, feat_dim] float32 per-graph node features
    adj_b:  [B, n_g, n_g]      float32 per-graph symmetric 0/1 adjacency
                               (the block-diagonal pieces of n2n_sp)
    params: dict of weights (pre-transposed to [in, out]) and biases [1, out]
    returns: [B, out_dim] float32 graph embeddings
    """
    B, n_g, feat_dim = feat_b.shape
    latent_dim = params["w_n2l"].shape[1]
    out_dim = params["w_out"].shape[1]

    LANE, SUB = 128, 8
    n_pad = _round_up(n_g, SUB)
    lat_pad = _round_up(latent_dim, LANE)
    out_pad = _round_up(out_dim, LANE)

    G = _choose_graphs_per_step(n_pad)
    B_pad = _round_up(B, G)
    S = B_pad // G                      # grid length (super-steps)
    n_super = G * n_pad                 # rows per super-block

    # ---- pack features: (S, G*n_pad, feat_dim) bf16, node rows zero-padded ----
    feat_p = jnp.zeros((B_pad, n_pad, feat_dim), jnp.float32)
    feat_p = feat_p.at[:B, :n_g, :].set(feat_b)
    feat_super = feat_p.reshape(S, n_super, feat_dim).astype(jnp.bfloat16)

    # ---- pack adjacency: block-diagonal (G*n_pad)^2 bf16 super-tile / step ----
    adj_p = jnp.zeros((B_pad, n_pad, n_pad), jnp.float32)
    adj_p = adj_p.at[:B, :n_g, :n_g].set(adj_b)
    blocks = adj_p.reshape(S, G, n_pad, n_pad)
    eye_g = jnp.eye(G, dtype=jnp.float32)
    adj_super = (blocks[:, :, :, None, :] * eye_g[None, :, None, :, None]
                 ).reshape(S, n_super, n_super).astype(jnp.bfloat16)

    # ---- weights (bf16 for MXU) / biases (f32); padded rows/cols are zero ----
    def pad2(w, r, c, dtype):
        return (jnp.zeros((r, c), jnp.float32)
                .at[:w.shape[0], :w.shape[1]].set(w).astype(dtype))

    wn = pad2(params["w_n2l"], feat_dim, lat_pad, jnp.bfloat16)
    bn = pad2(params["b_n2l"], 1, lat_pad, jnp.float32)
    wc = pad2(params["w_conv"], lat_pad, lat_pad, jnp.bfloat16)
    bc = pad2(params["b_conv"], 1, lat_pad, jnp.float32)
    wo = pad2(params["w_out"], lat_pad, out_pad, jnp.bfloat16)
    bo = pad2(params["b_out"], 1, out_pad, jnp.float32)

    kernel = make_graph_ebd_kernel(max_lv, n_g, n_pad, G, out_pad)

    # Weights/biases: constant block index -> stay resident across grid steps.
    resident = lambda a: pl.BlockSpec(a.shape, lambda s, _nd=a.ndim: (0,) * _nd)

    out = pl.pallas_call(
        kernel,
        out_shape=jax.ShapeDtypeStruct((B_pad, out_pad), jnp.float32),
        grid_spec=pltpu.PrefetchScalarGridSpec(
            num_scalar_prefetch=0,
            grid=(S,),
            in_specs=[
                pl.BlockSpec((1, n_super, feat_dim), lambda s: (s, 0, 0)),
                pl.BlockSpec((1, n_super, n_super), lambda s: (s, 0, 0)),
                resident(wn), resident(bn),
                resident(wc), resident(bc),
                resident(wo), resident(bo),
            ],
            out_specs=pl.BlockSpec((G, out_pad), lambda s: (s, 0)),
        ),
        compiler_params=pltpu.CompilerParams(
            dimension_semantics=("parallel",)),
    )(feat_super, adj_super, wn, bn, wc, bc, wo, bo)

    return out[:B, :out_dim]


def init_params(key, feat_dim, latent_dim, out_dim):
    """Deterministic synthetic parameters (PyTorch nn.Linear shapes, pre-transposed)."""
    k1, k2, k3, k4, k5, k6 = jax.random.split(key, 6)
    scale = 0.1
    return {
        "w_n2l": scale * jax.random.normal(k1, (feat_dim, latent_dim), jnp.float32),
        "b_n2l": scale * jax.random.normal(k2, (1, latent_dim), jnp.float32),
        "w_conv": scale * jax.random.normal(k3, (latent_dim, latent_dim), jnp.float32),
        "b_conv": scale * jax.random.normal(k4, (1, latent_dim), jnp.float32),
        "w_out": scale * jax.random.normal(k5, (latent_dim, out_dim), jnp.float32),
        "b_out": scale * jax.random.normal(k6, (1, out_dim), jnp.float32),
    }


def build_synthetic_batch(key, num_graphs, nodes_per_graph, feat_dim):
    """Per-graph dense analogues of PrepareFeatureLabel / PrepareMeanField."""
    kf, ka = jax.random.split(key)
    feat_b = jax.random.normal(kf, (num_graphs, nodes_per_graph, feat_dim),
                               jnp.float32)
    a = jax.random.bernoulli(
        ka, 0.4, (num_graphs, nodes_per_graph, nodes_per_graph)).astype(jnp.float32)
    a = jnp.triu(a, 1)
    adj_b = a + jnp.swapaxes(a, 1, 2)      # symmetric 0/1, no self loops
    return feat_b, adj_b


def to_dense(feat_b, adj_b):
    """Dense concatenated representation (n2n_sp / subg_sp) for the reference."""
    B, n_g, feat_dim = feat_b.shape
    node_feat = feat_b.reshape(B * n_g, feat_dim)
    adj = jax.scipy.linalg.block_diag(*[adj_b[g] for g in range(B)])
    node_graph = jnp.repeat(jnp.arange(B), n_g)
    pool = (node_graph[None, :] == jnp.arange(B)[:, None]).astype(jnp.float32)
    return node_feat, adj, pool


def reference_forward(node_feat, adj, pool, params, max_lv=3):
    """Plain-JAX f32 reference mirroring EmbedMeanField.mean_field."""
    msg = node_feat @ params["w_n2l"] + params["b_n2l"]
    h = jnp.maximum(msg, 0.0)
    for _ in range(max_lv):
        h = jnp.maximum((adj @ h) @ params["w_conv"] + params["b_conv"] + msg, 0.0)
    out = jnp.maximum(h @ params["w_out"] + params["b_out"], 0.0)
    return jnp.maximum(pool @ out, 0.0)


if __name__ == "__main__":
    NUM_GRAPHS = 2
    NODES_PER_GRAPH = 8
    FEAT_DIM = 8
    LATENT_DIM = 32
    OUT_DIM = 32
    MAX_LV = 3

    key = jax.random.PRNGKey(0)
    k_data, k_param = jax.random.split(key)

    feat_b, adj_b = build_synthetic_batch(
        k_data, NUM_GRAPHS, NODES_PER_GRAPH, FEAT_DIM)
    params = init_params(k_param, FEAT_DIM, LATENT_DIM, OUT_DIM)

    embed = graph_ebd_forward(feat_b, adj_b, params, max_lv=MAX_LV)
    embed = jax.block_until_ready(embed)

    node_feat, adj, pool = to_dense(feat_b, adj_b)
    ref = reference_forward(node_feat, adj, pool, params, max_lv=MAX_LV)

    assert embed.shape == (NUM_GRAPHS, OUT_DIM)
    # Tolerance reflects the all-bf16 matmul path (f32 accumulation) vs the
    # pure-f32 reference; adjacency itself (0/1) is exact in bf16.
    assert jnp.allclose(embed, ref, rtol=5e-2, atol=5e-2), (
        float(jnp.max(jnp.abs(embed - ref))))

    print("KERNEL_OK")
</pallas_src>

<mosaic_0001>
module attributes {stable_mosaic.version = 11 : i64} {
  func.func @kernel(%arg0: i32, %arg1: memref<1x256x8xbf16, #tpu.memory_space<vmem>>, %arg2: memref<1x256x256xbf16, #tpu.memory_space<vmem>>, %arg3: memref<8x128xbf16, #tpu.memory_space<vmem>>, %arg4: memref<1x128xf32, #tpu.memory_space<vmem>>, %arg5: memref<128x128xbf16, #tpu.memory_space<vmem>>, %arg6: memref<1x128xf32, #tpu.memory_space<vmem>>, %arg7: memref<128x128xbf16, #tpu.memory_space<vmem>>, %arg8: memref<1x128xf32, #tpu.memory_space<vmem>>, %arg9: memref<32x128xf32, #tpu.memory_space<vmem>>) attributes {dimension_semantics = [#tpu.dimension_semantics<parallel>], iteration_bounds = array<i64: 1>, scalar_prefetch = 0 : i64, scratch_operands = 0 : i64, tpu.core_type = #tpu.core_type<tc>, window_params = [{transform_indices = @transform_0, window_bounds = array<i64: 1, 256, 8>}, {transform_indices = @transform_1, window_bounds = array<i64: 1, 256, 256>}, {pipeline_mode = #tpu.pipeline_mode<synchronous>, transform_indices = @transform_2, window_bounds = array<i64: 8, 128>}, {pipeline_mode = #tpu.pipeline_mode<synchronous>, transform_indices = @transform_3, window_bounds = array<i64: 1, 128>}, {pipeline_mode = #tpu.pipeline_mode<synchronous>, transform_indices = @transform_4, window_bounds = array<i64: 128, 128>}, {pipeline_mode = #tpu.pipeline_mode<synchronous>, transform_indices = @transform_5, window_bounds = array<i64: 1, 128>}, {pipeline_mode = #tpu.pipeline_mode<synchronous>, transform_indices = @transform_6, window_bounds = array<i64: 128, 128>}, {pipeline_mode = #tpu.pipeline_mode<synchronous>, transform_indices = @transform_7, window_bounds = array<i64: 1, 128>}, {transform_indices = @transform_8, window_bounds = array<i64: 32, 128>}]} {
    %c0 = arith.constant 0 : index
    %c0_0 = arith.constant 0 : index
    %c0_1 = arith.constant 0 : index
    %0 = vector.load %arg1[%c0, %c0_0, %c0_1] : memref<1x256x8xbf16, #tpu.memory_space<vmem>>, vector<1x256x8xbf16>
    %1 = vector.shape_cast %0 : vector<1x256x8xbf16> to vector<256x8xbf16>
    %c0_2 = arith.constant 0 : index
    %c0_3 = arith.constant 0 : index
    %c0_4 = arith.constant 0 : index
    %2 = vector.load %arg2[%c0_2, %c0_3, %c0_4] : memref<1x256x256xbf16, #tpu.memory_space<vmem>>, vector<1x256x256xbf16>
    %3 = vector.shape_cast %2 : vector<1x256x256xbf16> to vector<256x256xbf16>
    %c0_5 = arith.constant 0 : index
    %c0_6 = arith.constant 0 : index
    %4 = vector.load %arg3[%c0_5, %c0_6] : memref<8x128xbf16, #tpu.memory_space<vmem>>, vector<8x128xbf16>
    %cst = arith.constant dense<0.000000e+00> : vector<256x128xf32>
    %5 = tpu.matmul %1, %4, %cst {dimension_numbers = #tpu.dot_dimension_numbers<[1], [0], [0], [1], [0, 0, 1, 1], [], []>} : vector<256x8xbf16>, vector<8x128xbf16>, vector<256x128xf32> -> vector<256x128xf32>
    %c0_7 = arith.constant 0 : index
    %c0_8 = arith.constant 0 : index
    %6 = vector.load %arg4[%c0_7, %c0_8] : memref<1x128xf32, #tpu.memory_space<vmem>>, vector<1x128xf32>
    %7 = vector.broadcast %6 : vector<1x128xf32> to vector<256x128xf32>
    %8 = arith.addf %5, %7 : vector<256x128xf32>
    %c0_9 = arith.constant 0 : index
    %c0_10 = arith.constant 0 : index
    %9 = vector.load %arg6[%c0_9, %c0_10] : memref<1x128xf32, #tpu.memory_space<vmem>>, vector<1x128xf32>
    %10 = vector.broadcast %9 : vector<1x128xf32> to vector<256x128xf32>
    %11 = arith.addf %8, %10 : vector<256x128xf32>
    %cst_11 = arith.constant 0.000000e+00 : f32
    %12 = vector.broadcast %cst_11 : f32 to vector<256x128xf32>
    %13 = arith.maximumf %8, %12 : vector<256x128xf32>
    %14 = arith.truncf %13 : vector<256x128xf32> to vector<256x128xbf16>
    %c0_12 = arith.constant 0 : index
    %c0_13 = arith.constant 0 : index
    %15 = vector.load %arg5[%c0_12, %c0_13] : memref<128x128xbf16, #tpu.memory_space<vmem>>, vector<128x128xbf16>
    %cst_14 = arith.constant dense<0.000000e+00> : vector<256x128xf32>
    %16 = tpu.matmul %3, %14, %cst_14 {dimension_numbers = #tpu.dot_dimension_numbers<[1], [0], [0], [1], [0, 0, 1, 1], [], []>} : vector<256x256xbf16>, vector<256x128xbf16>, vector<256x128xf32> -> vector<256x128xf32>
    %17 = arith.truncf %16 : vector<256x128xf32> to vector<256x128xbf16>
    %cst_15 = arith.constant dense<0.000000e+00> : vector<256x128xf32>
    %18 = tpu.matmul %17, %15, %cst_15 {dimension_numbers = #tpu.dot_dimension_numbers<[1], [0], [0], [1], [0, 0, 1, 1], [], []>} : vector<256x128xbf16>, vector<128x128xbf16>, vector<256x128xf32> -> vector<256x128xf32>
    %19 = arith.addf %18, %11 : vector<256x128xf32>
    %cst_16 = arith.constant 0.000000e+00 : f32
    %20 = vector.broadcast %cst_16 : f32 to vector<256x128xf32>
    %21 = arith.maximumf %19, %20 : vector<256x128xf32>
    %22 = arith.truncf %21 : vector<256x128xf32> to vector<256x128xbf16>
    %cst_17 = arith.constant dense<0.000000e+00> : vector<256x128xf32>
    %23 = tpu.matmul %3, %22, %cst_17 {dimension_numbers = #tpu.dot_dimension_numbers<[1], [0], [0], [1], [0, 0, 1, 1], [], []>} : vector<256x256xbf16>, vector<256x128xbf16>, vector<256x128xf32> -> vector<256x128xf32>
    %24 = arith.truncf %23 : vector<256x128xf32> to vector<256x128xbf16>
    %cst_18 = arith.constant dense<0.000000e+00> : vector<256x128xf32>
    %25 = tpu.matmul %24, %15, %cst_18 {dimension_numbers = #tpu.dot_dimension_numbers<[1], [0], [0], [1], [0, 0, 1, 1], [], []>} : vector<256x128xbf16>, vector<128x128xbf16>, vector<256x128xf32> -> vector<256x128xf32>
    %26 = arith.addf %25, %11 : vector<256x128xf32>
    %cst_19 = arith.constant 0.000000e+00 : f32
    %27 = vector.broadcast %cst_19 : f32 to vector<256x128xf32>
    %28 = arith.maximumf %26, %27 : vector<256x128xf32>
    %29 = arith.truncf %28 : vector<256x128xf32> to vector<256x128xbf16>
    %cst_20 = arith.constant dense<0.000000e+00> : vector<256x128xf32>
    %30 = tpu.matmul %3, %29, %cst_20 {dimension_numbers = #tpu.dot_dimension_numbers<[1], [0], [0], [1], [0, 0, 1, 1], [], []>} : vector<256x256xbf16>, vector<256x128xbf16>, vector<256x128xf32> -> vector<256x128xf32>
    %31 = arith.truncf %30 : vector<256x128xf32> to vector<256x128xbf16>
    %cst_21 = arith.constant dense<0.000000e+00> : vector<256x128xf32>
    %32 = tpu.matmul %31, %15, %cst_21 {dimension_numbers = #tpu.dot_dimension_numbers<[1], [0], [0], [1], [0, 0, 1, 1], [], []>} : vector<256x128xbf16>, vector<128x128xbf16>, vector<256x128xf32> -> vector<256x128xf32>
    %33 = arith.addf %32, %11 : vector<256x128xf32>
    %cst_22 = arith.constant 0.000000e+00 : f32
    %34 = vector.broadcast %cst_22 : f32 to vector<256x128xf32>
    %35 = arith.maximumf %33, %34 : vector<256x128xf32>
    %36 = arith.truncf %35 : vector<256x128xf32> to vector<256x128xbf16>
    %c0_23 = arith.constant 0 : index
    %c0_24 = arith.constant 0 : index
    %37 = vector.load %arg7[%c0_23, %c0_24] : memref<128x128xbf16, #tpu.memory_space<vmem>>, vector<128x128xbf16>
    %cst_25 = arith.constant dense<0.000000e+00> : vector<256x128xf32>
    %38 = tpu.matmul %36, %37, %cst_25 {dimension_numbers = #tpu.dot_dimension_numbers<[1], [0], [0], [1], [0, 0, 1, 1], [], []>} : vector<256x128xbf16>, vector<128x128xbf16>, vector<256x128xf32> -> vector<256x128xf32>
    %c0_26 = arith.constant 0 : index
    %c0_27 = arith.constant 0 : index
    %39 = vector.load %arg8[%c0_26, %c0_27] : memref<1x128xf32, #tpu.memory_space<vmem>>, vector<1x128xf32>
    %40 = vector.broadcast %39 : vector<1x128xf32> to vector<256x128xf32>
    %41 = arith.addf %38, %40 : vector<256x128xf32>
    %cst_28 = arith.constant 0.000000e+00 : f32
    %42 = vector.broadcast %cst_28 : f32 to vector<256x128xf32>
    %43 = arith.maximumf %41, %42 : vector<256x128xf32>
    %44 = vector.shape_cast %43 : vector<256x128xf32> to vector<32x8x128xf32>
    %cst_29 = arith.constant dense<0.000000e+00> : vector<32x128xf32>
    %45 = vector.multi_reduction <add>, %44, %cst_29 [1] : vector<32x8x128xf32> to vector<32x128xf32>
    %c0_30 = arith.constant 0 : index
    %c0_31 = arith.constant 0 : index
    %46 = vector.load %arg9[%c0_30, %c0_31] : memref<32x128xf32, #tpu.memory_space<vmem>>, vector<32x128xf32>
    tpu.vector_store %arg9[%c0_30, %c0_31], %45 {strides = array<i32>} : memref<32x128xf32, #tpu.memory_space<vmem>>, vector<32x128xf32>,
    return
  }
  func.func @transform_0(%arg0: i32) -> (i32, i32, i32) {
    %c0_i32 = arith.constant 0 : i32
    %c0_i32_0 = arith.constant 0 : i32
    %c0_i32_1 = arith.constant 0 : i32
    return %arg0, %c0_i32, %c0_i32_0 : i32, i32, i32
  }
  func.func @transform_1(%arg0: i32) -> (i32, i32, i32) {
    %c0_i32 = arith.constant 0 : i32
    %c0_i32_0 = arith.constant 0 : i32
    %c0_i32_1 = arith.constant 0 : i32
    return %arg0, %c0_i32, %c0_i32_0 : i32, i32, i32
  }
  func.func @transform_2(%arg0: i32) -> (i32, i32) {
    %c0_i32 = arith.constant 0 : i32
    %c0_i32_0 = arith.constant 0 : i32
    %c0_i32_1 = arith.constant 0 : i32
    return %c0_i32, %c0_i32_0 : i32, i32
  }
  func.func @transform_3(%arg0: i32) -> (i32, i32) {
    %c0_i32 = arith.constant 0 : i32
    %c0_i32_0 = arith.constant 0 : i32
    %c0_i32_1 = arith.constant 0 : i32
    return %c0_i32, %c0_i32_0 : i32, i32
  }
  func.func @transform_4(%arg0: i32) -> (i32, i32) {
    %c0_i32 = arith.constant 0 : i32
    %c0_i32_0 = arith.constant 0 : i32
    %c0_i32_1 = arith.constant 0 : i32
    return %c0_i32, %c0_i32_0 : i32, i32
  }
  func.func @transform_5(%arg0: i32) -> (i32, i32) {
    %c0_i32 = arith.constant 0 : i32
    %c0_i32_0 = arith.constant 0 : i32
    %c0_i32_1 = arith.constant 0 : i32
    return %c0_i32, %c0_i32_0 : i32, i32
  }
  func.func @transform_6(%arg0: i32) -> (i32, i32) {
    %c0_i32 = arith.constant 0 : i32
    %c0_i32_0 = arith.constant 0 : i32
    %c0_i32_1 = arith.constant 0 : i32
    return %c0_i32, %c0_i32_0 : i32, i32
  }
  func.func @transform_7(%arg0: i32) -> (i32, i32) {
    %c0_i32 = arith.constant 0 : i32
    %c0_i32_0 = arith.constant 0 : i32
    %c0_i32_1 = arith.constant 0 : i32
    return %c0_i32, %c0_i32_0 : i32, i32
  }
  func.func @transform_8(%arg0: i32) -> (i32, i32) {
    %c0_i32 = arith.constant 0 : i32
    %c0_i32_0 = arith.constant 0 : i32
    return %arg0, %c0_i32 : i32, i32
  }
}

</mosaic_0001>

<llo_original>
// kernel: tpu_custom_call.1
$region0: #{tpu_custom_call.1}
  #allocation0 [shape = 'u32[]', space=smem, size = 0x4, offset = 0x4, fixed_abs, tag = 'smem constant byte address 0x4 - core index']
  #allocation1 [shape = 'u32[72,128]{1,0:T(1,128)}', space=vmem, size = 0x9000, scoped, tag = 'internal scratch']
  %s0 = inlined_call_operand.vmem [shape: bf16[1,256,8], index: 0, kind: input, shape index: {}]
  %s1 = inlined_call_operand.hbm [shape: bf16[1,256,256], index: 1, kind: input, shape index: {}]
  %s2 = inlined_call_operand.vmem [shape: bf16[8,128], index: 2, kind: input, shape index: {}]
  %s3 = inlined_call_operand.vmem [shape: f32[1,128], index: 3, kind: input, shape index: {}]
  %s4 = inlined_call_operand.vmem [shape: bf16[128,128], index: 4, kind: input, shape index: {}]
  %s5 = inlined_call_operand.vmem [shape: f32[1,128], index: 5, kind: input, shape index: {}]
  %s6 = inlined_call_operand.vmem [shape: bf16[128,128], index: 6, kind: input, shape index: {}]
  %s7 = inlined_call_operand.vmem [shape: f32[1,128], index: 7, kind: input, shape index: {}]
  %s8 = inlined_call_operand.hbm [shape: f32[32,128], index: 8, kind: output, shape index: {}]
  %s9 = sld [smem:[#allocation0]]
  $region46: #{tpu_custom_call.1} parent=0
    _
  %s11 = ssub.s32 1, %s9
  %s12 = scalar_select 0, %s11, %s9
  $region1: #{tpu_custom_call.1} parent=0
    #allocation2 [shape = 'u8[131072]{0}', space=vmem, size = 0x20000, scoped, tag = 'input window, operand 1, single buffered']
    #allocation3 [shape = 's32[1]{0}', space=sflag, size = 0x4, scoped, tag = 'scoped memory for tpu_custom_call.1']
    #allocation4 [shape = 's32[1]{0}', space=sflag, size = 0x4, scoped, tag = 'scoped memory for tpu_custom_call.1']
    #allocation5 [shape = 'u8[16384]{0}', space=vmem, size = 0x4000, scoped, tag = 'output window, operand 0, single buffered']
    %13 = vsyncpa [#allocation3], 0
    %14 = vsyncpa [#allocation4], 0
    // Predicated region
    $region2: #{tpu_custom_call.1} parent=1 // pred_check
      _
    $region3: #{tpu_custom_call.1} parent=1 // pred_check_branch
      %16 = sbr.rel (0) target = $region5
    $region4: #{tpu_custom_call.1} parent=1 // pred_region
      _
    $region5: #{tpu_custom_call.1} parent=1 // pred_fallthru
      _
    // Predicated region
    $region6: #{tpu_custom_call.1} parent=1 // pred_check
      _
    $region7: #{tpu_custom_call.1} parent=1 // pred_check_branch
      %18 = sbr.rel (0) target = $region9
    $region8: #{tpu_custom_call.1} parent=1 // pred_region
      %20 = vsyncadd [#allocation3], 0
      %s21 = sshll.u32 %s1, 4
      %s22 = int_to_ptr.hbm [resolvable:$true] %s21
      %s23 = sshll.u32 [#allocation2], 4
      %s24 = int_to_ptr.vmem [resolvable:$true] %s23
      %29 = dma.hbm_to_vmem [thread:$0]  %s22, 4096, %s24, [#allocation3], 128, 128, 8
    $region9: #{tpu_custom_call.1} parent=1 // pred_fallthru
      _
    // Predicated region
    $region10: #{tpu_custom_call.1} parent=1 // pred_check
      _
    $region11: #{tpu_custom_call.1} parent=1 // pred_check_branch
      %31 = sbr.rel (0) target = $region13
    $region12: #{tpu_custom_call.1} parent=1 // pred_region
      _
    $region13: #{tpu_custom_call.1} parent=1 // pred_fallthru
      _
    // Predicated region
    $region14: #{tpu_custom_call.1} parent=1 // pred_check
      _
    $region15: #{tpu_custom_call.1} parent=1 // pred_check_branch
      %33 = sbr.rel (0) target = $region17
    $region16: #{tpu_custom_call.1} parent=1 // pred_region
      _
    $region17: #{tpu_custom_call.1} parent=1 // pred_fallthru
      _
    // Predicated region
    $region18: #{tpu_custom_call.1} parent=1 // pred_check
      _
    $region19: #{tpu_custom_call.1} parent=1 // pred_check_branch
      %35 = sbr.rel (0) target = $region21
    $region20: #{tpu_custom_call.1} parent=1 // pred_region
      _
    $region21: #{tpu_custom_call.1} parent=1 // pred_fallthru
      _
    // Predicated region
    $region22: #{tpu_custom_call.1} parent=1 // pred_check
      _
    $region23: #{tpu_custom_call.1} parent=1 // pred_check_branch
      %37 = sbr.rel (0) target = $region25
    $region24: #{tpu_custom_call.1} parent=1 // pred_region
      _
    $region25: #{tpu_custom_call.1} parent=1 // pred_fallthru
      _
    // Predicated region
    $region26: #{tpu_custom_call.1} parent=1 // pred_check
      _
    $region27: #{tpu_custom_call.1} parent=1 // pred_check_branch
      %39 = sbr.rel (0) target = $region29
    $region28: #{tpu_custom_call.1} parent=1 // pred_region
      _
    $region29: #{tpu_custom_call.1} parent=1 // pred_fallthru
      _
    // Predicated region
    $region30: #{tpu_custom_call.1} parent=1 // pred_check
      _
    $region31: #{tpu_custom_call.1} parent=1 // pred_check_branch
      %41 = sbr.rel (0) target = $region33
    $region32: #{tpu_custom_call.1} parent=1 // pred_region
      _
    $region33: #{tpu_custom_call.1} parent=1 // pred_fallthru
      _
    // Predicated region
    $region34: #{tpu_custom_call.1} parent=1 // pred_check
      _
    $region35: #{tpu_custom_call.1} parent=1 // pred_check_branch
      %43 = sbr.rel (0) target = $region37
    $region36: #{tpu_custom_call.1} parent=1 // pred_region
      %45 = dma.done [#allocation3], 4096
    $region37: #{tpu_custom_call.1} parent=1 // pred_fallthru
      _
    %v47 = vld [vmem:[%s0] sm:$0xf]
    %v48 = vld [vmem:[%s0 + $0x4] sm:$0xf]
    %v49 = vld [vmem:[%s0 + $0x8] sm:$0xf]
    %v50 = vld [vmem:[%s0 + $0xc] sm:$0xf]
    %v51 = vld [vmem:[%s0 + $0x10] sm:$0xf]
    %v52 = vld [vmem:[%s0 + $0x14] sm:$0xf]
    %v53 = vld [vmem:[%s0 + $0x18] sm:$0xf]
    %v54 = vld [vmem:[%s0 + $0x1c] sm:$0xf]
    %v55 = vld [vmem:[%s0 + $0x20] sm:$0xf]
    %v56 = vld [vmem:[%s0 + $0x24] sm:$0xf]
    %v57 = vld [vmem:[%s0 + $0x28] sm:$0xf]
    %v58 = vld [vmem:[%s0 + $0x2c] sm:$0xf]
    %v59 = vld [vmem:[%s0 + $0x30] sm:$0xf]
    %v60 = vld [vmem:[%s0 + $0x34] sm:$0xf]
    %v61 = vld [vmem:[%s0 + $0x38] sm:$0xf]
    %v62 = vld [vmem:[%s0 + $0x3c] sm:$0xf]
    %v63 = vld [vmem:[%s0 + $0x40] sm:$0xf]
    %v64 = vld [vmem:[%s0 + $0x44] sm:$0xf]
    %v65 = vld [vmem:[%s0 + $0x48] sm:$0xf]
    %v66 = vld [vmem:[%s0 + $0x4c] sm:$0xf]
    %v67 = vld [vmem:[%s0 + $0x50] sm:$0xf]
    %v68 = vld [vmem:[%s0 + $0x54] sm:$0xf]
    %v69 = vld [vmem:[%s0 + $0x58] sm:$0xf]
    %v70 = vld [vmem:[%s0 + $0x5c] sm:$0xf]
    %v71 = vld [vmem:[%s0 + $0x60] sm:$0xf]
    %v72 = vld [vmem:[%s0 + $0x64] sm:$0xf]
    %v73 = vld [vmem:[%s0 + $0x68] sm:$0xf]
    %v74 = vld [vmem:[%s0 + $0x6c] sm:$0xf]
    %v75 = vld [vmem:[%s0 + $0x70] sm:$0xf]
    %v76 = vld [vmem:[%s0 + $0x74] sm:$0xf]
    %v77 = vld [vmem:[%s0 + $0x78] sm:$0xf]
    %v78 = vld [vmem:[%s0 + $0x7c] sm:$0xf]
    %v79 = vld [vmem:[#allocation2] sm:$0xff]
    %v80 = vld [vmem:[#allocation2 + $0x8] sm:$0xff]
    %v81 = vld [vmem:[#allocation2 + $0x10] sm:$0xff]
    %v82 = vld [vmem:[#allocation2 + $0x18] sm:$0xff]
    %v83 = vld [vmem:[#allocation2 + $0x20] sm:$0xff]
    %v84 = vld [vmem:[#allocation2 + $0x28] sm:$0xff]
    %v85 = vld [vmem:[#allocation2 + $0x30] sm:$0xff]
    %v86 = vld [vmem:[#allocation2 + $0x38] sm:$0xff]
    %v87 = vld [vmem:[#allocation2 + $0x40] sm:$0xff]
    %v88 = vld [vmem:[#allocation2 + $0x48] sm:$0xff]
    %v89 = vld [vmem:[#allocation2 + $0x50] sm:$0xff]
    %v90 = vld [vmem:[#allocation2 + $0x58] sm:$0xff]
    %v91 = vld [vmem:[#allocation2 + $0x60] sm:$0xff]
    %v92 = vld [vmem:[#allocation2 + $0x68] sm:$0xff]
    %v93 = vld [vmem:[#allocation2 + $0x70] sm:$0xff]
    %v94 = vld [vmem:[#allocation2 + $0x78] sm:$0xff]
    %v95 = vld [vmem:[#allocation2 + $0x80] sm:$0xff]
    %v96 = vld [vmem:[#allocation2 + $0x88] sm:$0xff]
    %v97 = vld [vmem:[#allocation2 + $0x90] sm:$0xff]
    %v98 = vld [vmem:[#allocation2 + $0x98] sm:$0xff]
    %v99 = vld [vmem:[#allocation2 + $0xa0] sm:$0xff]
    %v100 = vld [vmem:[#allocation2 + $0xa8] sm:$0xff]
    %v101 = vld [vmem:[#allocation2 + $0xb0] sm:$0xff]
    %v102 = vld [vmem:[#allocation2 + $0xb8] sm:$0xff]
    %v103 = vld [vmem:[#allocation2 + $0xc0] sm:$0xff]
    %v104 = vld [vmem:[#allocation2 + $0xc8] sm:$0xff]
    %v105 = vld [vmem:[#allocation2 + $0xd0] sm:$0xff]
    %v106 = vld [vmem:[#allocation2 + $0xd8] sm:$0xff]
    %v107 = vld [vmem:[#allocation2 + $0xe0] sm:$0xff]
    %v108 = vld [vmem:[#allocation2 + $0xe8] sm:$0xff]
    %v109 = vld [vmem:[#allocation2 + $0xf0] sm:$0xff]
    %v110 = vld [vmem:[#allocation2 + $0xf8] sm:$0xff]
    %v111 = vld [vmem:[%s2] sm:$0xf]
    %v112 = vld [vmem:[%s3] sm:$0x1]
    %v114 = vperm.slane %v112, 0
    %v148 = vunpack.c.l.b16 %v47
    %v149 = vunpack.c.l.b16 %v48
    %v150 = vunpack.c.l.b16 %v49
    %v151 = vunpack.c.l.b16 %v50
    %v152 = vunpack.c.l.b16 %v51
    %v153 = vunpack.c.l.b16 %v52
    %v154 = vunpack.c.l.b16 %v53
    %v155 = vunpack.c.l.b16 %v54
    %v156 = vunpack.c.l.b16 %v55
    %v157 = vunpack.c.l.b16 %v56
    %v158 = vunpack.c.l.b16 %v57
    %v159 = vunpack.c.l.b16 %v58
    %v160 = vunpack.c.l.b16 %v59
    %v161 = vunpack.c.l.b16 %v60
    %v162 = vunpack.c.l.b16 %v61
    %v163 = vunpack.c.l.b16 %v62
    %v164 = vunpack.c.l.b16 %v63
    %v165 = vunpack.c.l.b16 %v64
    %v166 = vunpack.c.l.b16 %v65
    %v167 = vunpack.c.l.b16 %v66
    %v168 = vunpack.c.l.b16 %v67
    %v169 = vunpack.c.l.b16 %v68
    %v170 = vunpack.c.l.b16 %v69
    %v171 = vunpack.c.l.b16 %v70
    %v172 = vunpack.c.l.b16 %v71
    %v173 = vunpack.c.l.b16 %v72
    %v174 = vunpack.c.l.b16 %v73
    %v175 = vunpack.c.l.b16 %v74
    %v176 = vunpack.c.l.b16 %v75
    %v177 = vunpack.c.l.b16 %v76
    %v178 = vunpack.c.l.b16 %v77
    %v179 = vunpack.c.l.b16 %v78
    %v180 = vpack.c.b16 %v149, %v148
    %v181 = vpack.c.b16 %v151, %v150
    %v182 = vpack.c.b16 %v153, %v152
    %v183 = vpack.c.b16 %v155, %v154
    %v184 = vpack.c.b16 %v157, %v156
    %v185 = vpack.c.b16 %v159, %v158
    %v186 = vpack.c.b16 %v161, %v160
    %v187 = vpack.c.b16 %v163, %v162
    %v188 = vpack.c.b16 %v165, %v164
    %v189 = vpack.c.b16 %v167, %v166
    %v190 = vpack.c.b16 %v169, %v168
    %v191 = vpack.c.b16 %v171, %v170
    %v192 = vpack.c.b16 %v173, %v172
    %v193 = vpack.c.b16 %v175, %v174
    %v194 = vpack.c.b16 %v177, %v176
    %v195 = vpack.c.b16 %v179, %v178
    %vm196 = vcmask 64512
    %v198 = vsel %vm196, %v180, 0
    %v201 = vsel %vm196, %v181, 0
    %v204 = vsel %vm196, %v182, 0
    %v207 = vsel %vm196, %v183, 0
    %v210 = vsel %vm196, %v184, 0
    %v213 = vsel %vm196, %v185, 0
    %v216 = vsel %vm196, %v186, 0
    %v219 = vsel %vm196, %v187, 0
    %v222 = vsel %vm196, %v188, 0
    %v225 = vsel %vm196, %v189, 0
    %v228 = vsel %vm196, %v190, 0
    %v231 = vsel %vm196, %v191, 0
    %v234 = vsel %vm196, %v192, 0
    %v237 = vsel %vm196, %v193, 0
    %v240 = vsel %vm196, %v194, 0
    %v243 = vsel %vm196, %v195, 0
    %vm245 = vcmask 1043456
    %v247 = vsel %vm245, %v111, 0
    %249 = vmatpush.bf16.msra.mxu0 0
    %250 = vmatpush.bf16.msra.mxu0 0
    %251 = vmatpush.bf16.msra.mxu0 0
    %252 = vmatpush.bf16.msra.mxu0 0
    %253 = vmatpush.bf16.msra.mxu0 0
    %254 = vmatpush.bf16.msra.mxu0 0
    %255 = vmatpush.bf16.msra.mxu0 0
    %256 = vmatpush.bf16.msra.mxu0 %v247
    %257 = vmatmul.bf16.gmra.mxu0 %v198
    %v258 = vpop.f32.mrf.mxu0
    %v259 = vadd.f32 %v114, %v258
    %v260 = vpop.f32.mrf.mxu0
    %v261 = vadd.f32 %v114, %v260
    %262 = vmatmul.bf16.gmra.mxu0 %v201
    %v263 = vpop.f32.mrf.mxu0
    %v264 = vadd.f32 %v114, %v263
    %v265 = vpop.f32.mrf.mxu0
    %v266 = vadd.f32 %v114, %v265
    %267 = vmatmul.bf16.gmra.mxu0 %v204
    %v268 = vpop.f32.mrf.mxu0
    %v269 = vadd.f32 %v114, %v268
    %v270 = vpop.f32.mrf.mxu0
    %v271 = vadd.f32 %v114, %v270
    %272 = vmatmul.bf16.gmra.mxu0 %v207
    %v273 = vpop.f32.mrf.mxu0
    %v274 = vadd.f32 %v114, %v273
    %v275 = vpop.f32.mrf.mxu0
    %v276 = vadd.f32 %v114, %v275
    %277 = vmatmul.bf16.gmra.mxu0 %v210
    %v278 = vpop.f32.mrf.mxu0
    %v279 = vadd.f32 %v114, %v278
    %v280 = vpop.f32.mrf.mxu0
    %v281 = vadd.f32 %v114, %v280
    %282 = vmatmul.bf16.gmra.mxu0 %v213
    %v283 = vpop.f32.mrf.mxu0
    %v284 = vadd.f32 %v114, %v283
    %v285 = vpop.f32.mrf.mxu0
    %v286 = vadd.f32 %v114, %v285
    %287 = vmatmul.bf16.gmra.mxu0 %v216
    %v288 = vpop.f32.mrf.mxu0
    %v289 = vadd.f32 %v114, %v288
    %v290 = vpop.f32.mrf.mxu0
    %v291 = vadd.f32 %v114, %v290
    %292 = vmatmul.bf16.gmra.mxu0 %v219
    %v293 = vpop.f32.mrf.mxu0
    %v294 = vadd.f32 %v114, %v293
    %v295 = vpop.f32.mrf.mxu0
    %v296 = vadd.f32 %v114, %v295
    %297 = vmatmul.bf16.gmra.mxu0 %v222
    %v298 = vpop.f32.mrf.mxu0
    %v299 = vadd.f32 %v114, %v298
    %v300 = vpop.f32.mrf.mxu0
    %v301 = vadd.f32 %v114, %v300
    %302 = vmatmul.bf16.gmra.mxu0 %v225
    %v303 = vpop.f32.mrf.mxu0
    %v304 = vadd.f32 %v114, %v303
    %v305 = vpop.f32.mrf.mxu0
    %v306 = vadd.f32 %v114, %v305
    %307 = vmatmul.bf16.gmra.mxu0 %v228
    %v308 = vpop.f32.mrf.mxu0
    %v309 = vadd.f32 %v114, %v308
    %v310 = vpop.f32.mrf.mxu0
    %v311 = vadd.f32 %v114, %v310
    %312 = vmatmul.bf16.gmra.mxu0 %v231
    %v313 = vpop.f32.mrf.mxu0
    %v314 = vadd.f32 %v114, %v313
    %v315 = vpop.f32.mrf.mxu0
    %v316 = vadd.f32 %v114, %v315
    %317 = vmatmul.bf16.gmra.mxu0 %v234
    %v318 = vpop.f32.mrf.mxu0
    %v319 = vadd.f32 %v114, %v318
    %v320 = vpop.f32.mrf.mxu0
    %v321 = vadd.f32 %v114, %v320
    %322 = vmatmul.bf16.gmra.mxu0 %v237
    %v323 = vpop.f32.mrf.mxu0
    %v324 = vadd.f32 %v114, %v323
    %v325 = vpop.f32.mrf.mxu0
    %v326 = vadd.f32 %v114, %v325
    %327 = vmatmul.bf16.gmra.mxu0 %v240
    %v328 = vpop.f32.mrf.mxu0
    %v329 = vadd.f32 %v114, %v328
    %v330 = vpop.f32.mrf.mxu0
    %v331 = vadd.f32 %v114, %v330
    %332 = vmatmul.bf16.gmra.mxu0 %v243
    %v333 = vpop.f32.mrf.mxu0
    %v334 = vadd.f32 %v114, %v333
    %v335 = vpop.f32.mrf.mxu0
    %v336 = vadd.f32 %v114, %v335
    %337 = vdwg.mxu0
    %v338 = vld [vmem:[%s5] sm:$0x1]
    %v340 = vperm.slane %v338, 0
    %v342 = vadd.f32 %v259, %v340
    %v343 = vadd.f32 %v261, %v340
    %v344 = vadd.f32 %v264, %v340
    %v345 = vadd.f32 %v266, %v340
    %v346 = vadd.f32 %v269, %v340
    %v347 = vadd.f32 %v271, %v340
    %v348 = vadd.f32 %v274, %v340
    %v349 = vadd.f32 %v276, %v340
    %v350 = vadd.f32 %v279, %v340
    %v351 = vadd.f32 %v281, %v340
    %v352 = vadd.f32 %v284, %v340
    %v353 = vadd.f32 %v286, %v340
    %v354 = vadd.f32 %v289, %v340
    %v355 = vadd.f32 %v291, %v340
    %v356 = vadd.f32 %v294, %v340
    %v357 = vadd.f32 %v296, %v340
    %v358 = vadd.f32 %v299, %v340
    %v359 = vadd.f32 %v301, %v340
    %v360 = vadd.f32 %v304, %v340
    %v361 = vadd.f32 %v306, %v340
    %v362 = vadd.f32 %v309, %v340
    %v363 = vadd.f32 %v311, %v340
    %v364 = vadd.f32 %v314, %v340
    %v365 = vadd.f32 %v316, %v340
    %v366 = vadd.f32 %v319, %v340
    %v367 = vadd.f32 %v321, %v340
    %v368 = vadd.f32 %v324, %v340
    %v369 = vadd.f32 %v326, %v340
    %v370 = vadd.f32 %v329, %v340
    %v371 = vadd.f32 %v331, %v340
    %v372 = vadd.f32 %v334, %v340
    %v373 = vadd.f32 %v336, %v340
    %v374 = vmax.f32 %v259, 0.0
    %v375 = vmax.f32 %v261, 0.0
    %v376 = vmax.f32 %v264, 0.0
    %v377 = vmax.f32 %v266, 0.0
    %v378 = vmax.f32 %v269, 0.0
    %v379 = vmax.f32 %v271, 0.0
    %v380 = vmax.f32 %v274, 0.0
    %v381 = vmax.f32 %v276, 0.0
    %v382 = vmax.f32 %v279, 0.0
    %v383 = vmax.f32 %v281, 0.0
    %v384 = vmax.f32 %v284, 0.0
    %v385 = vmax.f32 %v286, 0.0
    %v386 = vmax.f32 %v289, 0.0
    %v387 = vmax.f32 %v291, 0.0
    %v388 = vmax.f32 %v294, 0.0
    %v389 = vmax.f32 %v296, 0.0
    %v390 = vmax.f32 %v299, 0.0
    %v391 = vmax.f32 %v301, 0.0
    %v392 = vmax.f32 %v304, 0.0
    %v393 = vmax.f32 %v306, 0.0
    %v394 = vmax.f32 %v309, 0.0
    %v395 = vmax.f32 %v311, 0.0
    %v396 = vmax.f32 %v314, 0.0
    %v397 = vmax.f32 %v316, 0.0
    %v398 = vmax.f32 %v319, 0.0
    %v399 = vmax.f32 %v321, 0.0
    %v400 = vmax.f32 %v324, 0.0
    %v401 = vmax.f32 %v326, 0.0
    %v402 = vmax.f32 %v329, 0.0
    %v403 = vmax.f32 %v331, 0.0
    %v404 = vmax.f32 %v334, 0.0
    %v405 = vmax.f32 %v336, 0.0
    %v406 = vpack.c.bf16 %v375, %v374
    %v407 = vpack.c.bf16 %v377, %v376
    %v408 = vpack.c.bf16 %v379, %v378
    %v409 = vpack.c.bf16 %v381, %v380
    %v410 = vpack.c.bf16 %v383, %v382
    %v411 = vpack.c.bf16 %v385, %v384
    %v412 = vpack.c.bf16 %v387, %v386
    %v413 = vpack.c.bf16 %v389, %v388
    %v414 = vpack.c.bf16 %v391, %v390
    %v415 = vpack.c.bf16 %v393, %v392
    %v416 = vpack.c.bf16 %v395, %v394
    %v417 = vpack.c.bf16 %v397, %v396
    %v418 = vpack.c.bf16 %v399, %v398
    %v419 = vpack.c.bf16 %v401, %v400
    %v420 = vpack.c.bf16 %v403, %v402
    %v421 = vpack.c.bf16 %v405, %v404
    %v422 = vld [vmem:[%s4] sm:$0xf]
    %v423 = vld [vmem:[%s4 + $0x4] sm:$0xf]
    %v424 = vld [vmem:[%s4 + $0x8] sm:$0xf]
    %v425 = vld [vmem:[%s4 + $0xc] sm:$0xf]
    %v426 = vld [vmem:[%s4 + $0x10] sm:$0xf]
    %v427 = vld [vmem:[%s4 + $0x14] sm:$0xf]
    %v428 = vld [vmem:[%s4 + $0x18] sm:$0xf]
    %v429 = vld [vmem:[%s4 + $0x1c] sm:$0xf]
    %v430 = vld [vmem:[%s4 + $0x20] sm:$0xf]
    %v431 = vld [vmem:[%s4 + $0x24] sm:$0xf]
    %v432 = vld [vmem:[%s4 + $0x28] sm:$0xf]
    %v433 = vld [vmem:[%s4 + $0x2c] sm:$0xf]
    %v434 = vld [vmem:[%s4 + $0x30] sm:$0xf]
    %v435 = vld [vmem:[%s4 + $0x34] sm:$0xf]
    %v436 = vld [vmem:[%s4 + $0x38] sm:$0xf]
    %v437 = vld [vmem:[%s4 + $0x3c] sm:$0xf]
    %v470 = vunpack.c.l.b16 %v79
    %v471 = vunpack.c.h.b16 %v79
    %v472 = vunpack.c.l.b16 %v80
    %v473 = vunpack.c.h.b16 %v80
    %v474 = vunpack.c.l.b16 %v81
    %v475 = vunpack.c.h.b16 %v81
    %v476 = vunpack.c.l.b16 %v82
    %v477 = vunpack.c.h.b16 %v82
    %v478 = vunpack.c.l.b16 %v83
    %v479 = vunpack.c.h.b16 %v83
    %v480 = vunpack.c.l.b16 %v84
    %v481 = vunpack.c.h.b16 %v84
    %v482 = vunpack.c.l.b16 %v85
    %v483 = vunpack.c.h.b16 %v85
    %v484 = vunpack.c.l.b16 %v86
    %v485 = vunpack.c.h.b16 %v86
    %v486 = vunpack.c.l.b16 %v87
    %v487 = vunpack.c.h.b16 %v87
    %v488 = vunpack.c.l.b16 %v88
    %v489 = vunpack.c.h.b16 %v88
    %v490 = vunpack.c.l.b16 %v89
    %v491 = vunpack.c.h.b16 %v89
    %v492 = vunpack.c.l.b16 %v90
    %v493 = vunpack.c.h.b16 %v90
    %v494 = vunpack.c.l.b16 %v91
    %v495 = vunpack.c.h.b16 %v91
    %v496 = vunpack.c.l.b16 %v92
    %v497 = vunpack.c.h.b16 %v92
    %v498 = vunpack.c.l.b16 %v93
    %v499 = vunpack.c.h.b16 %v93
    %v500 = vunpack.c.l.b16 %v94
    %v501 = vunpack.c.h.b16 %v94
    %v502 = vunpack.c.l.b16 %v95
    %v503 = vunpack.c.h.b16 %v95
    %v504 = vunpack.c.l.b16 %v96
    %v505 = vunpack.c.h.b16 %v96
    %v506 = vunpack.c.l.b16 %v97
    %v507 = vunpack.c.h.b16 %v97
    %v508 = vunpack.c.l.b16 %v98
    %v509 = vunpack.c.h.b16 %v98
    %v510 = vunpack.c.l.b16 %v99
    %v511 = vunpack.c.h.b16 %v99
    %v512 = vunpack.c.l.b16 %v100
    %v513 = vunpack.c.h.b16 %v100
    %v514 = vunpack.c.l.b16 %v101
    %v515 = vunpack.c.h.b16 %v101
    %v516 = vunpack.c.l.b16 %v102
    %v517 = vunpack.c.h.b16 %v102
    %v518 = vunpack.c.l.b16 %v103
    %v519 = vunpack.c.h.b16 %v103
    %v520 = vunpack.c.l.b16 %v104
    %v521 = vunpack.c.h.b16 %v104
    %v522 = vunpack.c.l.b16 %v105
    %v523 = vunpack.c.h.b16 %v105
    %v524 = vunpack.c.l.b16 %v106
    %v525 = vunpack.c.h.b16 %v106
    %v526 = vunpack.c.l.b16 %v107
    %v527 = vunpack.c.h.b16 %v107
    %v528 = vunpack.c.l.b16 %v108
    %v529 = vunpack.c.h.b16 %v108
    %v530 = vunpack.c.l.b16 %v109
    %v531 = vunpack.c.h.b16 %v109
    %v532 = vunpack.c.l.b16 %v110
    %v533 = vunpack.c.h.b16 %v110
    %v534 = vpack.c.b16 %v472, %v470
    %v535 = vpack.c.b16 %v473, %v471
    %v536 = vpack.c.b16 %v476, %v474
    %v537 = vpack.c.b16 %v477, %v475
    %v538 = vpack.c.b16 %v480, %v478
    %v539 = vpack.c.b16 %v481, %v479
    %v540 = vpack.c.b16 %v484, %v482
    %v541 = vpack.c.b16 %v485, %v483
    %v542 = vpack.c.b16 %v488, %v486
    %v543 = vpack.c.b16 %v489, %v487
    %v544 = vpack.c.b16 %v492, %v490
    %v545 = vpack.c.b16 %v493, %v491
    %v546 = vpack.c.b16 %v496, %v494
    %v547 = vpack.c.b16 %v497, %v495
    %v548 = vpack.c.b16 %v500, %v498
    %v549 = vpack.c.b16 %v501, %v499
    %v550 = vpack.c.b16 %v504, %v502
    %v551 = vpack.c.b16 %v505, %v503
    %v552 = vpack.c.b16 %v508, %v506
    %v553 = vpack.c.b16 %v509, %v507
    %v554 = vpack.c.b16 %v512, %v510
    %v555 = vpack.c.b16 %v513, %v511
    %v556 = vpack.c.b16 %v516, %v514
    %v557 = vpack.c.b16 %v517, %v515
    %v558 = vpack.c.b16 %v520, %v518
    %v559 = vpack.c.b16 %v521, %v519
    %v560 = vpack.c.b16 %v524, %v522
    %v561 = vpack.c.b16 %v525, %v523
    %v562 = vpack.c.b16 %v528, %v526
    %v563 = vpack.c.b16 %v529, %v527
    %v564 = vpack.c.b16 %v532, %v530
    %v565 = vpack.c.b16 %v533, %v531
    %598 = vmatpush.bf16.msra.mxu0 %v413
    %599 = vmatpush.bf16.msra.mxu0 %v412
    %600 = vmatpush.bf16.msra.mxu0 %v411
    %601 = vmatpush.bf16.msra.mxu0 %v410
    %602 = vmatpush.bf16.msra.mxu0 %v409
    %603 = vmatpush.bf16.msra.mxu0 %v408
    %604 = vmatpush.bf16.msra.mxu0 %v407
    %605 = vmatpush.bf16.msra.mxu0 %v406
    %606 = vmatmul.bf16.gmra.mxu0 %v534
    %v607 = vpop.f32.mrf.mxu0
    %v608 = vadd.f32 0.0, %v607
    %v609 = vpop.f32.mrf.mxu0
    %v610 = vadd.f32 0.0, %v609
    %611 = vmatmul.bf16.gmra.mxu0 %v536
    %v612 = vpop.f32.mrf.mxu0
    %v613 = vadd.f32 0.0, %v612
    %v614 = vpop.f32.mrf.mxu0
    %v615 = vadd.f32 0.0, %v614
    %616 = vmatmul.bf16.gmra.mxu0 %v538
    %v617 = vpop.f32.mrf.mxu0
    %v618 = vadd.f32 0.0, %v617
    %v619 = vpop.f32.mrf.mxu0
    %v620 = vadd.f32 0.0, %v619
    %621 = vmatmul.bf16.gmra.mxu0 %v540
    %v622 = vpop.f32.mrf.mxu0
    %v623 = vadd.f32 0.0, %v622
    %v624 = vpop.f32.mrf.mxu0
    %v625 = vadd.f32 0.0, %v624
    %626 = vmatmul.bf16.gmra.mxu0 %v542
    %v627 = vpop.f32.mrf.mxu0
    %v628 = vadd.f32 0.0, %v627
    %v629 = vpop.f32.mrf.mxu0
    %v630 = vadd.f32 0.0, %v629
    %631 = vmatmul.bf16.gmra.mxu0 %v544
    %v632 = vpop.f32.mrf.mxu0
    %v633 = vadd.f32 0.0, %v632
    %v634 = vpop.f32.mrf.mxu0
    %v635 = vadd.f32 0.0, %v634
    %636 = vmatmul.bf16.gmra.mxu0 %v546
    %v637 = vpop.f32.mrf.mxu0
    %v638 = vadd.f32 0.0, %v637
    %v639 = vpop.f32.mrf.mxu0
    %v640 = vadd.f32 0.0, %v639
    %641 = vmatmul.bf16.gmra.mxu0 %v548
    %v642 = vpop.f32.mrf.mxu0
    %v643 = vadd.f32 0.0, %v642
    %v644 = vpop.f32.mrf.mxu0
    %v645 = vadd.f32 0.0, %v644
    %646 = vmatmul.bf16.gmra.mxu0 %v550
    %v647 = vpop.f32.mrf.mxu0
    %v648 = vadd.f32 0.0, %v647
    %v649 = vpop.f32.mrf.mxu0
    %v650 = vadd.f32 0.0, %v649
    %651 = vmatmul.bf16.gmra.mxu0 %v552
    %v652 = vpop.f32.mrf.mxu0
    %v653 = vadd.f32 0.0, %v652
    %v654 = vpop.f32.mrf.mxu0
    %v655 = vadd.f32 0.0, %v654
    %656 = vmatmul.bf16.gmra.mxu0 %v554
    %v657 = vpop.f32.mrf.mxu0
    %v658 = vadd.f32 0.0, %v657
    %v659 = vpop.f32.mrf.mxu0
    %v660 = vadd.f32 0.0, %v659
    %661 = vmatmul.bf16.gmra.mxu0 %v556
    %v662 = vpop.f32.mrf.mxu0
    %v663 = vadd.f32 0.0, %v662
    %v664 = vpop.f32.mrf.mxu0
    %v665 = vadd.f32 0.0, %v664
    %666 = vmatmul.bf16.gmra.mxu0 %v558
    %v667 = vpop.f32.mrf.mxu0
    %v668 = vadd.f32 0.0, %v667
    %v669 = vpop.f32.mrf.mxu0
    %v670 = vadd.f32 0.0, %v669
    %671 = vmatmul.bf16.gmra.mxu0 %v560
    %v672 = vpop.f32.mrf.mxu0
    %v673 = vadd.f32 0.0, %v672
    %v674 = vpop.f32.mrf.mxu0
    %v675 = vadd.f32 0.0, %v674
    %676 = vmatmul.bf16.gmra.mxu0 %v562
    %v677 = vpop.f32.mrf.mxu0
    %v678 = vadd.f32 0.0, %v677
    %v679 = vpop.f32.mrf.mxu0
    %v680 = vadd.f32 0.0, %v679
    %681 = vmatmul.bf16.gmra.mxu0 %v564
    %v682 = vpop.f32.mrf.mxu0
    %v683 = vadd.f32 0.0, %v682
    %v684 = vpop.f32.mrf.mxu0
    %v685 = vadd.f32 0.0, %v684
    %686 = vdwg.mxu0
    %687 = vmatpush.bf16.msra.mxu0 %v421
    %688 = vmatpush.bf16.msra.mxu0 %v420
    %689 = vmatpush.bf16.msra.mxu0 %v419
    %690 = vmatpush.bf16.msra.mxu0 %v418
    %691 = vmatpush.bf16.msra.mxu0 %v417
    %692 = vmatpush.bf16.msra.mxu0 %v416
    %693 = vmatpush.bf16.msra.mxu0 %v415
    %694 = vmatpush.bf16.msra.mxu0 %v414
    %695 = vmatmul.bf16.gmra.mxu0 %v535
    %v696 = vpop.f32.mrf.mxu0
    %v697 = vadd.f32 %v608, %v696
    %v698 = vpop.f32.mrf.mxu0
    %v699 = vadd.f32 %v610, %v698
    %700 = vmatmul.bf16.gmra.mxu0 %v537
    %v701 = vpop.f32.mrf.mxu0
    %v702 = vadd.f32 %v613, %v701
    %v703 = vpop.f32.mrf.mxu0
    %v704 = vadd.f32 %v615, %v703
    %705 = vmatmul.bf16.gmra.mxu0 %v539
    %v706 = vpop.f32.mrf.mxu0
    %v707 = vadd.f32 %v618, %v706
    %v708 = vpop.f32.mrf.mxu0
    %v709 = vadd.f32 %v620, %v708
    %710 = vmatmul.bf16.gmra.mxu0 %v541
    %v711 = vpop.f32.mrf.mxu0
    %v712 = vadd.f32 %v623, %v711
    %v713 = vpop.f32.mrf.mxu0
    %v714 = vadd.f32 %v625, %v713
    %715 = vmatmul.bf16.gmra.mxu0 %v543
    %v716 = vpop.f32.mrf.mxu0
    %v717 = vadd.f32 %v628, %v716
    %v718 = vpop.f32.mrf.mxu0
    %v719 = vadd.f32 %v630, %v718
    %720 = vmatmul.bf16.gmra.mxu0 %v545
    %v721 = vpop.f32.mrf.mxu0
    %v722 = vadd.f32 %v633, %v721
    %v723 = vpop.f32.mrf.mxu0
    %v724 = vadd.f32 %v635, %v723
    %725 = vmatmul.bf16.gmra.mxu0 %v547
    %v726 = vpop.f32.mrf.mxu0
    %v727 = vadd.f32 %v638, %v726
    %v728 = vpop.f32.mrf.mxu0
    %v729 = vadd.f32 %v640, %v728
    %730 = vmatmul.bf16.gmra.mxu0 %v549
    %v731 = vpop.f32.mrf.mxu0
    %v732 = vadd.f32 %v643, %v731
    %v733 = vpop.f32.mrf.mxu0
    %v734 = vadd.f32 %v645, %v733
    %735 = vmatmul.bf16.gmra.mxu0 %v551
    %v736 = vpop.f32.mrf.mxu0
    %v737 = vadd.f32 %v648, %v736
    %v738 = vpop.f32.mrf.mxu0
    %v739 = vadd.f32 %v650, %v738
    %740 = vmatmul.bf16.gmra.mxu0 %v553
    %v741 = vpop.f32.mrf.mxu0
    %v742 = vadd.f32 %v653, %v741
    %v743 = vpop.f32.mrf.mxu0
    %v744 = vadd.f32 %v655, %v743
    %745 = vmatmul.bf16.gmra.mxu0 %v555
    %v746 = vpop.f32.mrf.mxu0
    %v747 = vadd.f32 %v658, %v746
    %v748 = vpop.f32.mrf.mxu0
    %v749 = vadd.f32 %v660, %v748
    %750 = vmatmul.bf16.gmra.mxu0 %v557
    %v751 = vpop.f32.mrf.mxu0
    %v752 = vadd.f32 %v663, %v751
    %v753 = vpop.f32.mrf.mxu0
    %v754 = vadd.f32 %v665, %v753
    %755 = vmatmul.bf16.gmra.mxu0 %v559
    %v756 = vpop.f32.mrf.mxu0
    %v757 = vadd.f32 %v668, %v756
    %v758 = vpop.f32.mrf.mxu0
    %v759 = vadd.f32 %v670, %v758
    %760 = vmatmul.bf16.gmra.mxu0 %v561
    %v761 = vpop.f32.mrf.mxu0
    %v762 = vadd.f32 %v673, %v761
    %v763 = vpop.f32.mrf.mxu0
    %v764 = vadd.f32 %v675, %v763
    %765 = vmatmul.bf16.gmra.mxu0 %v563
    %v766 = vpop.f32.mrf.mxu0
    %v767 = vadd.f32 %v678, %v766
    %v768 = vpop.f32.mrf.mxu0
    %v769 = vadd.f32 %v680, %v768
    %770 = vmatmul.bf16.gmra.mxu0 %v565
    %v771 = vpop.f32.mrf.mxu0
    %v772 = vadd.f32 %v683, %v771
    %v773 = vpop.f32.mrf.mxu0
    %v774 = vadd.f32 %v685, %v773
    %775 = vdwg.mxu0
    %v776 = vpack.c.bf16 %v699, %v697
    %v777 = vpack.c.bf16 %v704, %v702
    %v778 = vpack.c.bf16 %v709, %v707
    %v779 = vpack.c.bf16 %v714, %v712
    %v780 = vpack.c.bf16 %v719, %v717
    %v781 = vpack.c.bf16 %v724, %v722
    %v782 = vpack.c.bf16 %v729, %v727
    %v783 = vpack.c.bf16 %v734, %v732
    %v784 = vpack.c.bf16 %v739, %v737
    %v785 = vpack.c.bf16 %v744, %v742
    %v786 = vpack.c.bf16 %v749, %v747
    %v787 = vpack.c.bf16 %v754, %v752
    %v788 = vpack.c.bf16 %v759, %v757
    %v789 = vpack.c.bf16 %v764, %v762
    %v790 = vpack.c.bf16 %v769, %v767
    %v791 = vpack.c.bf16 %v774, %v772
    %v808 = vunpack.c.l.b16 %v422
    %v809 = vunpack.c.l.b16 %v423
    %v810 = vunpack.c.l.b16 %v424
    %v811 = vunpack.c.l.b16 %v425
    %v812 = vunpack.c.l.b16 %v426
    %v813 = vunpack.c.l.b16 %v427
    %v814 = vunpack.c.l.b16 %v428
    %v815 = vunpack.c.l.b16 %v429
    %v816 = vunpack.c.l.b16 %v430
    %v817 = vunpack.c.l.b16 %v431
    %v818 = vunpack.c.l.b16 %v432
    %v819 = vunpack.c.l.b16 %v433
    %v820 = vunpack.c.l.b16 %v434
    %v821 = vunpack.c.l.b16 %v435
    %v822 = vunpack.c.l.b16 %v436
    %v823 = vunpack.c.l.b16 %v437
    %v824 = vpack.c.b16 %v809, %v808
    %v825 = vpack.c.b16 %v811, %v810
    %v826 = vpack.c.b16 %v813, %v812
    %v827 = vpack.c.b16 %v815, %v814
    %v828 = vpack.c.b16 %v817, %v816
    %v829 = vpack.c.b16 %v819, %v818
    %v830 = vpack.c.b16 %v821, %v820
    %v831 = vpack.c.b16 %v823, %v822
    %840 = vmatpush.bf16.msra.mxu0 %v831
    %841 = vmatpush.bf16.msra.mxu0 %v830
    %842 = vmatpush.bf16.msra.mxu0 %v829
    %843 = vmatpush.bf16.msra.mxu0 %v828
    %844 = vmatpush.bf16.msra.mxu0 %v827
    %845 = vmatpush.bf16.msra.mxu0 %v826
    %846 = vmatpush.bf16.msra.mxu0 %v825
    %847 = vmatpush.bf16.msra.mxu0 %v824
    %848 = vmatmul.bf16.gmra.mxu0 %v776
    %v849 = vpop.f32.mrf.mxu0
    %v850 = vadd.f32 %v342, %v849
    %v851 = vpop.f32.mrf.mxu0
    %v852 = vadd.f32 %v343, %v851
    %853 = vmatmul.bf16.gmra.mxu0 %v777
    %v854 = vpop.f32.mrf.mxu0
    %v855 = vadd.f32 %v344, %v854
    %v856 = vpop.f32.mrf.mxu0
    %v857 = vadd.f32 %v345, %v856
    %858 = vmatmul.bf16.gmra.mxu0 %v778
    %v859 = vpop.f32.mrf.mxu0
    %v860 = vadd.f32 %v346, %v859
    %v861 = vpop.f32.mrf.mxu0
    %v862 = vadd.f32 %v347, %v861
    %863 = vmatmul.bf16.gmra.mxu0 %v779
    %v864 = vpop.f32.mrf.mxu0
    %v865 = vadd.f32 %v348, %v864
    %v866 = vpop.f32.mrf.mxu0
    %v867 = vadd.f32 %v349, %v866
    %868 = vmatmul.bf16.gmra.mxu0 %v780
    %v869 = vpop.f32.mrf.mxu0
    %v870 = vadd.f32 %v350, %v869
    %v871 = vpop.f32.mrf.mxu0
    %v872 = vadd.f32 %v351, %v871
    %873 = vmatmul.bf16.gmra.mxu0 %v781
    %v874 = vpop.f32.mrf.mxu0
    %v875 = vadd.f32 %v352, %v874
    %v876 = vpop.f32.mrf.mxu0
    %v877 = vadd.f32 %v353, %v876
    %878 = vmatmul.bf16.gmra.mxu0 %v782
    %v879 = vpop.f32.mrf.mxu0
    %v880 = vadd.f32 %v354, %v879
    %v881 = vpop.f32.mrf.mxu0
    %v882 = vadd.f32 %v355, %v881
    %883 = vmatmul.bf16.gmra.mxu0 %v783
    %v884 = vpop.f32.mrf.mxu0
    %v885 = vadd.f32 %v356, %v884
    %v886 = vpop.f32.mrf.mxu0
    %v887 = vadd.f32 %v357, %v886
    %888 = vmatmul.bf16.gmra.mxu0 %v784
    %v889 = vpop.f32.mrf.mxu0
    %v890 = vadd.f32 %v358, %v889
    %v891 = vpop.f32.mrf.mxu0
    %v892 = vadd.f32 %v359, %v891
    %893 = vmatmul.bf16.gmra.mxu0 %v785
    %v894 = vpop.f32.mrf.mxu0
    %v895 = vadd.f32 %v360, %v894
    %v896 = vpop.f32.mrf.mxu0
    %v897 = vadd.f32 %v361, %v896
    %898 = vmatmul.bf16.gmra.mxu0 %v786
    %v899 = vpop.f32.mrf.mxu0
    %v900 = vadd.f32 %v362, %v899
    %v901 = vpop.f32.mrf.mxu0
    %v902 = vadd.f32 %v363, %v901
    %903 = vmatmul.bf16.gmra.mxu0 %v787
    %v904 = vpop.f32.mrf.mxu0
    %v905 = vadd.f32 %v364, %v904
    %v906 = vpop.f32.mrf.mxu0
    %v907 = vadd.f32 %v365, %v906
    %908 = vmatmul.bf16.gmra.mxu0 %v788
    %v909 = vpop.f32.mrf.mxu0
    %v910 = vadd.f32 %v366, %v909
    %v911 = vpop.f32.mrf.mxu0
    %v912 = vadd.f32 %v367, %v911
    %913 = vmatmul.bf16.gmra.mxu0 %v789
    %v914 = vpop.f32.mrf.mxu0
    %v915 = vadd.f32 %v368, %v914
    %v916 = vpop.f32.mrf.mxu0
    %v917 = vadd.f32 %v369, %v916
    %918 = vmatmul.bf16.gmra.mxu0 %v790
    %v919 = vpop.f32.mrf.mxu0
    %v920 = vadd.f32 %v370, %v919
    %v921 = vpop.f32.mrf.mxu0
    %v922 = vadd.f32 %v371, %v921
    %923 = vmatmul.bf16.gmra.mxu0 %v791
    %v924 = vpop.f32.mrf.mxu0
    %v925 = vadd.f32 %v372, %v924
    %v926 = vpop.f32.mrf.mxu0
    %v927 = vadd.f32 %v373, %v926
    %928 = vdwg.mxu0
    %v929 = vmax.f32 %v850, 0.0
    %v930 = vmax.f32 %v852, 0.0
    %v931 = vmax.f32 %v855, 0.0
    %v932 = vmax.f32 %v857, 0.0
    %v933 = vmax.f32 %v860, 0.0
    %v934 = vmax.f32 %v862, 0.0
    %v935 = vmax.f32 %v865, 0.0
    %v936 = vmax.f32 %v867, 0.0
    %v937 = vmax.f32 %v870, 0.0
    %v938 = vmax.f32 %v872, 0.0
    %v939 = vmax.f32 %v875, 0.0
    %v940 = vmax.f32 %v877, 0.0
    %v941 = vmax.f32 %v880, 0.0
    %v942 = vmax.f32 %v882, 0.0
    %v943 = vmax.f32 %v885, 0.0
    %v944 = vmax.f32 %v887, 0.0
    %v945 = vmax.f32 %v890, 0.0
    %v946 = vmax.f32 %v892, 0.0
    %v947 = vmax.f32 %v895, 0.0
    %v948 = vmax.f32 %v897, 0.0
    %v949 = vmax.f32 %v900, 0.0
    %v950 = vmax.f32 %v902, 0.0
    %v951 = vmax.f32 %v905, 0.0
    %v952 = vmax.f32 %v907, 0.0
    %v953 = vmax.f32 %v910, 0.0
    %v954 = vmax.f32 %v912, 0.0
    %v955 = vmax.f32 %v915, 0.0
    %v956 = vmax.f32 %v917, 0.0
    %v957 = vmax.f32 %v920, 0.0
    %v958 = vmax.f32 %v922, 0.0
    %v959 = vmax.f32 %v925, 0.0
    %v960 = vmax.f32 %v927, 0.0
    %v961 = vpack.c.bf16 %v930, %v929
    %v962 = vpack.c.bf16 %v932, %v931
    %v963 = vpack.c.bf16 %v934, %v933
    %v964 = vpack.c.bf16 %v936, %v935
    %v965 = vpack.c.bf16 %v938, %v937
    %v966 = vpack.c.bf16 %v940, %v939
    %v967 = vpack.c.bf16 %v942, %v941
    %v968 = vpack.c.bf16 %v944, %v943
    %v969 = vpack.c.bf16 %v946, %v945
    %v970 = vpack.c.bf16 %v948, %v947
    %v971 = vpack.c.bf16 %v950, %v949
    %v972 = vpack.c.bf16 %v952, %v951
    %v973 = vpack.c.bf16 %v954, %v953
    %v974 = vpack.c.bf16 %v956, %v955
    %v975 = vpack.c.bf16 %v958, %v957
    %v976 = vpack.c.bf16 %v960, %v959
    %977 = vmatpush.bf16.msra.mxu0 %v968
    %978 = vmatpush.bf16.msra.mxu0 %v967
    %979 = vmatpush.bf16.msra.mxu0 %v966
    %980 = vmatpush.bf16.msra.mxu0 %v965
    %981 = vmatpush.bf16.msra.mxu0 %v964
    %982 = vmatpush.bf16.msra.mxu0 %v963
    %983 = vmatpush.bf16.msra.mxu0 %v962
    %984 = vmatpush.bf16.msra.mxu0 %v961
    %985 = vmatmul.bf16.gmra.mxu0 %v534
    %v986 = vpop.f32.mrf.mxu0
    %v987 = vadd.f32 0.0, %v986
    %v988 = vpop.f32.mrf.mxu0
    %v989 = vadd.f32 0.0, %v988
    %990 = vmatmul.bf16.gmra.mxu0 %v536
    %v991 = vpop.f32.mrf.mxu0
    %v992 = vadd.f32 0.0, %v991
    %v993 = vpop.f32.mrf.mxu0
    %v994 = vadd.f32 0.0, %v993
    %995 = vmatmul.bf16.gmra.mxu0 %v538
    %v996 = vpop.f32.mrf.mxu0
    %v997 = vadd.f32 0.0, %v996
    %v998 = vpop.f32.mrf.mxu0
    %v999 = vadd.f32 0.0, %v998
    %1000 = vmatmul.bf16.gmra.mxu0 %v540
    %v1001 = vpop.f32.mrf.mxu0
    %v1002 = vadd.f32 0.0, %v1001
    %v1003 = vpop.f32.mrf.mxu0
    %v1004 = vadd.f32 0.0, %v1003
    %1005 = vmatmul.bf16.gmra.mxu0 %v542
    %v1006 = vpop.f32.mrf.mxu0
    %v1007 = vadd.f32 0.0, %v1006
    %v1008 = vpop.f32.mrf.mxu0
    %v1009 = vadd.f32 0.0, %v1008
    %1010 = vmatmul.bf16.gmra.mxu0 %v544
    %v1011 = vpop.f32.mrf.mxu0
    %v1012 = vadd.f32 0.0, %v1011
    %v1013 = vpop.f32.mrf.mxu0
    %v1014 = vadd.f32 0.0, %v1013
    %1015 = vmatmul.bf16.gmra.mxu0 %v546
    %v1016 = vpop.f32.mrf.mxu0
    %v1017 = vadd.f32 0.0, %v1016
    %v1018 = vpop.f32.mrf.mxu0
    %v1019 = vadd.f32 0.0, %v1018
    %1020 = vmatmul.bf16.gmra.mxu0 %v548
    %v1021 = vpop.f32.mrf.mxu0
    %v1022 = vadd.f32 0.0, %v1021
    %v1023 = vpop.f32.mrf.mxu0
    %v1024 = vadd.f32 0.0, %v1023
    %1025 = vmatmul.bf16.gmra.mxu0 %v550
    %v1026 = vpop.f32.mrf.mxu0
    %v1027 = vadd.f32 0.0, %v1026
    %v1028 = vpop.f32.mrf.mxu0
    %v1029 = vadd.f32 0.0, %v1028
    %1030 = vmatmul.bf16.gmra.mxu0 %v552
    %v1031 = vpop.f32.mrf.mxu0
    %v1032 = vadd.f32 0.0, %v1031
    %v1033 = vpop.f32.mrf.mxu0
    %v1034 = vadd.f32 0.0, %v1033
    %1035 = vmatmul.bf16.gmra.mxu0 %v554
    %v1036 = vpop.f32.mrf.mxu0
    %v1037 = vadd.f32 0.0, %v1036
    %v1038 = vpop.f32.mrf.mxu0
    %v1039 = vadd.f32 0.0, %v1038
    %1040 = vmatmul.bf16.gmra.mxu0 %v556
    %v1041 = vpop.f32.mrf.mxu0
    %v1042 = vadd.f32 0.0, %v1041
    %v1043 = vpop.f32.mrf.mxu0
    %v1044 = vadd.f32 0.0, %v1043
    %1045 = vmatmul.bf16.gmra.mxu0 %v558
    %v1046 = vpop.f32.mrf.mxu0
    %v1047 = vadd.f32 0.0, %v1046
    %v1048 = vpop.f32.mrf.mxu0
    %v1049 = vadd.f32 0.0, %v1048
    %1050 = vmatmul.bf16.gmra.mxu0 %v560
    %v1051 = vpop.f32.mrf.mxu0
    %v1052 = vadd.f32 0.0, %v1051
    %v1053 = vpop.f32.mrf.mxu0
    %v1054 = vadd.f32 0.0, %v1053
    %1055 = vmatmul.bf16.gmra.mxu0 %v562
    %v1056 = vpop.f32.mrf.mxu0
    %v1057 = vadd.f32 0.0, %v1056
    %v1058 = vpop.f32.mrf.mxu0
    %v1059 = vadd.f32 0.0, %v1058
    %1060 = vmatmul.bf16.gmra.mxu0 %v564
    %v1061 = vpop.f32.mrf.mxu0
    %v1062 = vadd.f32 0.0, %v1061
    %v1063 = vpop.f32.mrf.mxu0
    %v1064 = vadd.f32 0.0, %v1063
    %1065 = vdwg.mxu0
    %1066 = vmatpush.bf16.msra.mxu0 %v976
    %1067 = vmatpush.bf16.msra.mxu0 %v975
    %1068 = vmatpush.bf16.msra.mxu0 %v974
    %1069 = vmatpush.bf16.msra.mxu0 %v973
    %1070 = vmatpush.bf16.msra.mxu0 %v972
    %1071 = vmatpush.bf16.msra.mxu0 %v971
    %1072 = vmatpush.bf16.msra.mxu0 %v970
    %1073 = vmatpush.bf16.msra.mxu0 %v969
    %1074 = vmatmul.bf16.gmra.mxu0 %v535
    %v1075 = vpop.f32.mrf.mxu0
    %v1076 = vadd.f32 %v987, %v1075
    %v1077 = vpop.f32.mrf.mxu0
    %v1078 = vadd.f32 %v989, %v1077
    %1079 = vmatmul.bf16.gmra.mxu0 %v537
    %v1080 = vpop.f32.mrf.mxu0
    %v1081 = vadd.f32 %v992, %v1080
    %v1082 = vpop.f32.mrf.mxu0
    %v1083 = vadd.f32 %v994, %v1082
    %1084 = vmatmul.bf16.gmra.mxu0 %v539
    %v1085 = vpop.f32.mrf.mxu0
    %v1086 = vadd.f32 %v997, %v1085
    %v1087 = vpop.f32.mrf.mxu0
    %v1088 = vadd.f32 %v999, %v1087
    %1089 = vmatmul.bf16.gmra.mxu0 %v541
    %v1090 = vpop.f32.mrf.mxu0
    %v1091 = vadd.f32 %v1002, %v1090
    %v1092 = vpop.f32.mrf.mxu0
    %v1093 = vadd.f32 %v1004, %v1092
    %1094 = vmatmul.bf16.gmra.mxu0 %v543
    %v1095 = vpop.f32.mrf.mxu0
    %v1096 = vadd.f32 %v1007, %v1095
    %v1097 = vpop.f32.mrf.mxu0
    %v1098 = vadd.f32 %v1009, %v1097
    %1099 = vmatmul.bf16.gmra.mxu0 %v545
    %v1100 = vpop.f32.mrf.mxu0
    %v1101 = vadd.f32 %v1012, %v1100
    %v1102 = vpop.f32.mrf.mxu0
    %v1103 = vadd.f32 %v1014, %v1102
    %1104 = vmatmul.bf16.gmra.mxu0 %v547
    %v1105 = vpop.f32.mrf.mxu0
    %v1106 = vadd.f32 %v1017, %v1105
    %v1107 = vpop.f32.mrf.mxu0
    %v1108 = vadd.f32 %v1019, %v1107
    %1109 = vmatmul.bf16.gmra.mxu0 %v549
    %v1110 = vpop.f32.mrf.mxu0
    %v1111 = vadd.f32 %v1022, %v1110
    %v1112 = vpop.f32.mrf.mxu0
    %v1113 = vadd.f32 %v1024, %v1112
    %1114 = vmatmul.bf16.gmra.mxu0 %v551
    %v1115 = vpop.f32.mrf.mxu0
    %v1116 = vadd.f32 %v1027, %v1115
    %v1117 = vpop.f32.mrf.mxu0
    %v1118 = vadd.f32 %v1029, %v1117
    %1119 = vmatmul.bf16.gmra.mxu0 %v553
    %v1120 = vpop.f32.mrf.mxu0
    %v1121 = vadd.f32 %v1032, %v1120
    %v1122 = vpop.f32.mrf.mxu0
    %v1123 = vadd.f32 %v1034, %v1122
    %1124 = vmatmul.bf16.gmra.mxu0 %v555
    %v1125 = vpop.f32.mrf.mxu0
    %v1126 = vadd.f32 %v1037, %v1125
    %v1127 = vpop.f32.mrf.mxu0
    %v1128 = vadd.f32 %v1039, %v1127
    %1129 = vmatmul.bf16.gmra.mxu0 %v557
    %v1130 = vpop.f32.mrf.mxu0
    %v1131 = vadd.f32 %v1042, %v1130
    %v1132 = vpop.f32.mrf.mxu0
    %v1133 = vadd.f32 %v1044, %v1132
    %1134 = vmatmul.bf16.gmra.mxu0 %v559
    %v1135 = vpop.f32.mrf.mxu0
    %v1136 = vadd.f32 %v1047, %v1135
    %v1137 = vpop.f32.mrf.mxu0
    %v1138 = vadd.f32 %v1049, %v1137
    %1139 = vmatmul.bf16.gmra.mxu0 %v561
    %v1140 = vpop.f32.mrf.mxu0
    %v1141 = vadd.f32 %v1052, %v1140
    %v1142 = vpop.f32.mrf.mxu0
    %v1143 = vadd.f32 %v1054, %v1142
    %1144 = vmatmul.bf16.gmra.mxu0 %v563
    %v1145 = vpop.f32.mrf.mxu0
    %v1146 = vadd.f32 %v1057, %v1145
    %v1147 = vpop.f32.mrf.mxu0
    %v1148 = vadd.f32 %v1059, %v1147
    %1149 = vmatmul.bf16.gmra.mxu0 %v565
    %v1150 = vpop.f32.mrf.mxu0
    %v1151 = vadd.f32 %v1062, %v1150
    %v1152 = vpop.f32.mrf.mxu0
    %v1153 = vadd.f32 %v1064, %v1152
    %1154 = vdwg.mxu0
    %v1155 = vpack.c.bf16 %v1078, %v1076
    %v1156 = vpack.c.bf16 %v1083, %v1081
    %v1157 = vpack.c.bf16 %v1088, %v1086
    %v1158 = vpack.c.bf16 %v1093, %v1091
    %v1159 = vpack.c.bf16 %v1098, %v1096
    %v1160 = vpack.c.bf16 %v1103, %v1101
    %v1161 = vpack.c.bf16 %v1108, %v1106
    %v1162 = vpack.c.bf16 %v1113, %v1111
    %v1163 = vpack.c.bf16 %v1118, %v1116
    %v1164 = vpack.c.bf16 %v1123, %v1121
    %v1165 = vpack.c.bf16 %v1128, %v1126
    %v1166 = vpack.c.bf16 %v1133, %v1131
    %v1167 = vpack.c.bf16 %v1138, %v1136
    %v1168 = vpack.c.bf16 %v1143, %v1141
    %v1169 = vpack.c.bf16 %v1148, %v1146
    %v1170 = vpack.c.bf16 %v1153, %v1151
    %1171 = vmatpush.bf16.msra.mxu0 %v831
    %1172 = vmatpush.bf16.msra.mxu0 %v830
    %1173 = vmatpush.bf16.msra.mxu0 %v829
    %1174 = vmatpush.bf16.msra.mxu0 %v828
    %1175 = vmatpush.bf16.msra.mxu0 %v827
    %1176 = vmatpush.bf16.msra.mxu0 %v826
    %1177 = vmatpush.bf16.msra.mxu0 %v825
    %1178 = vmatpush.bf16.msra.mxu0 %v824
    %1179 = vmatmul.bf16.gmra.mxu0 %v1155
    %v1180 = vpop.f32.mrf.mxu0
    %v1181 = vadd.f32 %v342, %v1180
    %v1182 = vpop.f32.mrf.mxu0
    %v1183 = vadd.f32 %v343, %v1182
    %1184 = vmatmul.bf16.gmra.mxu0 %v1156
    %v1185 = vpop.f32.mrf.mxu0
    %v1186 = vadd.f32 %v344, %v1185
    %v1187 = vpop.f32.mrf.mxu0
    %v1188 = vadd.f32 %v345, %v1187
    %1189 = vmatmul.bf16.gmra.mxu0 %v1157
    %v1190 = vpop.f32.mrf.mxu0
    %v1191 = vadd.f32 %v346, %v1190
    %v1192 = vpop.f32.mrf.mxu0
    %v1193 = vadd.f32 %v347, %v1192
    %1194 = vmatmul.bf16.gmra.mxu0 %v1158
    %v1195 = vpop.f32.mrf.mxu0
    %v1196 = vadd.f32 %v348, %v1195
    %v1197 = vpop.f32.mrf.mxu0
    %v1198 = vadd.f32 %v349, %v1197
    %1199 = vmatmul.bf16.gmra.mxu0 %v1159
    %v1200 = vpop.f32.mrf.mxu0
    %v1201 = vadd.f32 %v350, %v1200
    %v1202 = vpop.f32.mrf.mxu0
    %v1203 = vadd.f32 %v351, %v1202
    %1204 = vmatmul.bf16.gmra.mxu0 %v1160
    %v1205 = vpop.f32.mrf.mxu0
    %v1206 = vadd.f32 %v352, %v1205
    %v1207 = vpop.f32.mrf.mxu0
    %v1208 = vadd.f32 %v353, %v1207
    %1209 = vmatmul.bf16.gmra.mxu0 %v1161
    %v1210 = vpop.f32.mrf.mxu0
    %v1211 = vadd.f32 %v354, %v1210
    %v1212 = vpop.f32.mrf.mxu0
    %v1213 = vadd.f32 %v355, %v1212
    %1214 = vmatmul.bf16.gmra.mxu0 %v1162
    %v1215 = vpop.f32.mrf.mxu0
    %v1216 = vadd.f32 %v356, %v1215
    %v1217 = vpop.f32.mrf.mxu0
    %v1218 = vadd.f32 %v357, %v1217
    %1219 = vmatmul.bf16.gmra.mxu0 %v1163
    %v1220 = vpop.f32.mrf.mxu0
    %v1221 = vadd.f32 %v358, %v1220
    %v1222 = vpop.f32.mrf.mxu0
    %v1223 = vadd.f32 %v359, %v1222
    %1224 = vmatmul.bf16.gmra.mxu0 %v1164
    %v1225 = vpop.f32.mrf.mxu0
    %v1226 = vadd.f32 %v360, %v1225
    %v1227 = vpop.f32.mrf.mxu0
    %v1228 = vadd.f32 %v361, %v1227
    %1229 = vmatmul.bf16.gmra.mxu0 %v1165
    %v1230 = vpop.f32.mrf.mxu0
    %v1231 = vadd.f32 %v362, %v1230
    %v1232 = vpop.f32.mrf.mxu0
    %v1233 = vadd.f32 %v363, %v1232
    %1234 = vmatmul.bf16.gmra.mxu0 %v1166
    %v1235 = vpop.f32.mrf.mxu0
    %v1236 = vadd.f32 %v364, %v1235
    %v1237 = vpop.f32.mrf.mxu0
    %v1238 = vadd.f32 %v365, %v1237
    %1239 = vmatmul.bf16.gmra.mxu0 %v1167
    %v1240 = vpop.f32.mrf.mxu0
    %v1241 = vadd.f32 %v366, %v1240
    %v1242 = vpop.f32.mrf.mxu0
    %v1243 = vadd.f32 %v367, %v1242
    %1244 = vmatmul.bf16.gmra.mxu0 %v1168
    %v1245 = vpop.f32.mrf.mxu0
    %v1246 = vadd.f32 %v368, %v1245
    %v1247 = vpop.f32.mrf.mxu0
    %v1248 = vadd.f32 %v369, %v1247
    %1249 = vmatmul.bf16.gmra.mxu0 %v1169
    %v1250 = vpop.f32.mrf.mxu0
    %v1251 = vadd.f32 %v370, %v1250
    %v1252 = vpop.f32.mrf.mxu0
    %v1253 = vadd.f32 %v371, %v1252
    %1254 = vmatmul.bf16.gmra.mxu0 %v1170
    %v1255 = vpop.f32.mrf.mxu0
    %v1256 = vadd.f32 %v372, %v1255
    %v1257 = vpop.f32.mrf.mxu0
    %v1258 = vadd.f32 %v373, %v1257
    %1259 = vdwg.mxu0
    %v1260 = vmax.f32 %v1181, 0.0
    %v1261 = vmax.f32 %v1183, 0.0
    %v1262 = vmax.f32 %v1186, 0.0
    %v1263 = vmax.f32 %v1188, 0.0
    %v1264 = vmax.f32 %v1191, 0.0
    %v1265 = vmax.f32 %v1193, 0.0
    %v1266 = vmax.f32 %v1196, 0.0
    %v1267 = vmax.f32 %v1198, 0.0
    %v1268 = vmax.f32 %v1201, 0.0
    %v1269 = vmax.f32 %v1203, 0.0
    %v1270 = vmax.f32 %v1206, 0.0
    %v1271 = vmax.f32 %v1208, 0.0
    %v1272 = vmax.f32 %v1211, 0.0
    %v1273 = vmax.f32 %v1213, 0.0
    %v1274 = vmax.f32 %v1216, 0.0
    %v1275 = vmax.f32 %v1218, 0.0
    %v1276 = vmax.f32 %v1221, 0.0
    %v1277 = vmax.f32 %v1223, 0.0
    %v1278 = vmax.f32 %v1226, 0.0
    %v1279 = vmax.f32 %v1228, 0.0
    %v1280 = vmax.f32 %v1231, 0.0
    %v1281 = vmax.f32 %v1233, 0.0
    %v1282 = vmax.f32 %v1236, 0.0
    %v1283 = vmax.f32 %v1238, 0.0
    %v1284 = vmax.f32 %v1241, 0.0
    %v1285 = vmax.f32 %v1243, 0.0
    %v1286 = vmax.f32 %v1246, 0.0
    %v1287 = vmax.f32 %v1248, 0.0
    %v1288 = vmax.f32 %v1251, 0.0
    %v1289 = vmax.f32 %v1253, 0.0
    %v1290 = vmax.f32 %v1256, 0.0
    %v1291 = vmax.f32 %v1258, 0.0
    %v1292 = vpack.c.bf16 %v1261, %v1260
    %v1293 = vpack.c.bf16 %v1263, %v1262
    %v1294 = vpack.c.bf16 %v1265, %v1264
    %v1295 = vpack.c.bf16 %v1267, %v1266
    %v1296 = vpack.c.bf16 %v1269, %v1268
    %v1297 = vpack.c.bf16 %v1271, %v1270
    %v1298 = vpack.c.bf16 %v1273, %v1272
    %v1299 = vpack.c.bf16 %v1275, %v1274
    %v1300 = vpack.c.bf16 %v1277, %v1276
    %v1301 = vpack.c.bf16 %v1279, %v1278
    %v1302 = vpack.c.bf16 %v1281, %v1280
    %v1303 = vpack.c.bf16 %v1283, %v1282
    %v1304 = vpack.c.bf16 %v1285, %v1284
    %v1305 = vpack.c.bf16 %v1287, %v1286
    %v1306 = vpack.c.bf16 %v1289, %v1288
    %v1307 = vpack.c.bf16 %v1291, %v1290
    %1308 = vmatpush.bf16.msra.mxu0 %v1299
    %1309 = vmatpush.bf16.msra.mxu0 %v1298
    %1310 = vmatpush.bf16.msra.mxu0 %v1297
    %1311 = vmatpush.bf16.msra.mxu0 %v1296
    %1312 = vmatpush.bf16.msra.mxu0 %v1295
    %1313 = vmatpush.bf16.msra.mxu0 %v1294
    %1314 = vmatpush.bf16.msra.mxu0 %v1293
    %1315 = vmatpush.bf16.msra.mxu0 %v1292
    %1316 = vmatmul.bf16.gmra.mxu0 %v534
    %v1317 = vpop.f32.mrf.mxu0
    %v1318 = vadd.f32 0.0, %v1317
    %v1319 = vpop.f32.mrf.mxu0
    %v1320 = vadd.f32 0.0, %v1319
    %1321 = vmatmul.bf16.gmra.mxu0 %v536
    %v1322 = vpop.f32.mrf.mxu0
    %v1323 = vadd.f32 0.0, %v1322
    %v1324 = vpop.f32.mrf.mxu0
    %v1325 = vadd.f32 0.0, %v1324
    %1326 = vmatmul.bf16.gmra.mxu0 %v538
    %v1327 = vpop.f32.mrf.mxu0
    %v1328 = vadd.f32 0.0, %v1327
    %v1329 = vpop.f32.mrf.mxu0
    %v1330 = vadd.f32 0.0, %v1329
    %1331 = vmatmul.bf16.gmra.mxu0 %v540
    %v1332 = vpop.f32.mrf.mxu0
    %v1333 = vadd.f32 0.0, %v1332
    %v1334 = vpop.f32.mrf.mxu0
    %v1335 = vadd.f32 0.0, %v1334
    %1336 = vmatmul.bf16.gmra.mxu0 %v542
    %v1337 = vpop.f32.mrf.mxu0
    %v1338 = vadd.f32 0.0, %v1337
    %v1339 = vpop.f32.mrf.mxu0
    %v1340 = vadd.f32 0.0, %v1339
    %1341 = vmatmul.bf16.gmra.mxu0 %v544
    %v1342 = vpop.f32.mrf.mxu0
    %v1343 = vadd.f32 0.0, %v1342
    %v1344 = vpop.f32.mrf.mxu0
    %v1345 = vadd.f32 0.0, %v1344
    %1346 = vmatmul.bf16.gmra.mxu0 %v546
    %v1347 = vpop.f32.mrf.mxu0
    %v1348 = vadd.f32 0.0, %v1347
    %v1349 = vpop.f32.mrf.mxu0
    %v1350 = vadd.f32 0.0, %v1349
    %1351 = vmatmul.bf16.gmra.mxu0 %v548
    %v1352 = vpop.f32.mrf.mxu0
    %v1353 = vadd.f32 0.0, %v1352
    %v1354 = vpop.f32.mrf.mxu0
    %v1355 = vadd.f32 0.0, %v1354
    %1356 = vmatmul.bf16.gmra.mxu0 %v550
    %v1357 = vpop.f32.mrf.mxu0
    %v1358 = vadd.f32 0.0, %v1357
    %v1359 = vpop.f32.mrf.mxu0
    %v1360 = vadd.f32 0.0, %v1359
    %1361 = vmatmul.bf16.gmra.mxu0 %v552
    %v1362 = vpop.f32.mrf.mxu0
    %v1363 = vadd.f32 0.0, %v1362
    %v1364 = vpop.f32.mrf.mxu0
    %v1365 = vadd.f32 0.0, %v1364
    %1366 = vmatmul.bf16.gmra.mxu0 %v554
    %v1367 = vpop.f32.mrf.mxu0
    %v1368 = vadd.f32 0.0, %v1367
    %v1369 = vpop.f32.mrf.mxu0
    %v1370 = vadd.f32 0.0, %v1369
    %1371 = vmatmul.bf16.gmra.mxu0 %v556
    %v1372 = vpop.f32.mrf.mxu0
    %v1373 = vadd.f32 0.0, %v1372
    %v1374 = vpop.f32.mrf.mxu0
    %v1375 = vadd.f32 0.0, %v1374
    %1376 = vmatmul.bf16.gmra.mxu0 %v558
    %v1377 = vpop.f32.mrf.mxu0
    %v1378 = vadd.f32 0.0, %v1377
    %v1379 = vpop.f32.mrf.mxu0
    %v1380 = vadd.f32 0.0, %v1379
    %1381 = vmatmul.bf16.gmra.mxu0 %v560
    %v1382 = vpop.f32.mrf.mxu0
    %v1383 = vadd.f32 0.0, %v1382
    %v1384 = vpop.f32.mrf.mxu0
    %v1385 = vadd.f32 0.0, %v1384
    %1386 = vmatmul.bf16.gmra.mxu0 %v562
    %v1387 = vpop.f32.mrf.mxu0
    %v1388 = vadd.f32 0.0, %v1387
    %v1389 = vpop.f32.mrf.mxu0
    %v1390 = vadd.f32 0.0, %v1389
    %1391 = vmatmul.bf16.gmra.mxu0 %v564
    %v1392 = vpop.f32.mrf.mxu0
    %v1393 = vadd.f32 0.0, %v1392
    %v1394 = vpop.f32.mrf.mxu0
    %v1395 = vadd.f32 0.0, %v1394
    %1396 = vdwg.mxu0
    %1397 = vmatpush.bf16.msra.mxu0 %v1307
    %1398 = vmatpush.bf16.msra.mxu0 %v1306
    %1399 = vmatpush.bf16.msra.mxu0 %v1305
    %1400 = vmatpush.bf16.msra.mxu0 %v1304
    %1401 = vmatpush.bf16.msra.mxu0 %v1303
    %1402 = vmatpush.bf16.msra.mxu0 %v1302
    %1403 = vmatpush.bf16.msra.mxu0 %v1301
    %1404 = vmatpush.bf16.msra.mxu0 %v1300
    %1405 = vmatmul.bf16.gmra.mxu0 %v535
    %v1406 = vpop.f32.mrf.mxu0
    %v1407 = vadd.f32 %v1318, %v1406
    %v1408 = vpop.f32.mrf.mxu0
    %v1409 = vadd.f32 %v1320, %v1408
    %1410 = vmatmul.bf16.gmra.mxu0 %v537
    %v1411 = vpop.f32.mrf.mxu0
    %v1412 = vadd.f32 %v1323, %v1411
    %v1413 = vpop.f32.mrf.mxu0
    %v1414 = vadd.f32 %v1325, %v1413
    %1415 = vmatmul.bf16.gmra.mxu0 %v539
    %v1416 = vpop.f32.mrf.mxu0
    %v1417 = vadd.f32 %v1328, %v1416
    %v1418 = vpop.f32.mrf.mxu0
    %v1419 = vadd.f32 %v1330, %v1418
    %1420 = vmatmul.bf16.gmra.mxu0 %v541
    %v1421 = vpop.f32.mrf.mxu0
    %v1422 = vadd.f32 %v1333, %v1421
    %v1423 = vpop.f32.mrf.mxu0
    %v1424 = vadd.f32 %v1335, %v1423
    %1425 = vmatmul.bf16.gmra.mxu0 %v543
    %v1426 = vpop.f32.mrf.mxu0
    %v1427 = vadd.f32 %v1338, %v1426
    %v1428 = vpop.f32.mrf.mxu0
    %v1429 = vadd.f32 %v1340, %v1428
    %1430 = vmatmul.bf16.gmra.mxu0 %v545
    %v1431 = vpop.f32.mrf.mxu0
    %v1432 = vadd.f32 %v1343, %v1431
    %v1433 = vpop.f32.mrf.mxu0
    %v1434 = vadd.f32 %v1345, %v1433
    %1435 = vmatmul.bf16.gmra.mxu0 %v547
    %v1436 = vpop.f32.mrf.mxu0
    %v1437 = vadd.f32 %v1348, %v1436
    %v1438 = vpop.f32.mrf.mxu0
    %v1439 = vadd.f32 %v1350, %v1438
    %1440 = vmatmul.bf16.gmra.mxu0 %v549
    %v1441 = vpop.f32.mrf.mxu0
    %v1442 = vadd.f32 %v1353, %v1441
    %v1443 = vpop.f32.mrf.mxu0
    %v1444 = vadd.f32 %v1355, %v1443
    %1445 = vmatmul.bf16.gmra.mxu0 %v551
    %v1446 = vpop.f32.mrf.mxu0
    %v1447 = vadd.f32 %v1358, %v1446
    %v1448 = vpop.f32.mrf.mxu0
    %v1449 = vadd.f32 %v1360, %v1448
    %1450 = vmatmul.bf16.gmra.mxu0 %v553
    %v1451 = vpop.f32.mrf.mxu0
    %v1452 = vadd.f32 %v1363, %v1451
    %v1453 = vpop.f32.mrf.mxu0
    %v1454 = vadd.f32 %v1365, %v1453
    %1455 = vmatmul.bf16.gmra.mxu0 %v555
    %v1456 = vpop.f32.mrf.mxu0
    %v1457 = vadd.f32 %v1368, %v1456
    %v1458 = vpop.f32.mrf.mxu0
    %v1459 = vadd.f32 %v1370, %v1458
    %1460 = vmatmul.bf16.gmra.mxu0 %v557
    %v1461 = vpop.f32.mrf.mxu0
    %v1462 = vadd.f32 %v1373, %v1461
    %v1463 = vpop.f32.mrf.mxu0
    %v1464 = vadd.f32 %v1375, %v1463
    %1465 = vmatmul.bf16.gmra.mxu0 %v559
    %v1466 = vpop.f32.mrf.mxu0
    %v1467 = vadd.f32 %v1378, %v1466
    %v1468 = vpop.f32.mrf.mxu0
    %v1469 = vadd.f32 %v1380, %v1468
    %1470 = vmatmul.bf16.gmra.mxu0 %v561
    %v1471 = vpop.f32.mrf.mxu0
    %v1472 = vadd.f32 %v1383, %v1471
    %v1473 = vpop.f32.mrf.mxu0
    %v1474 = vadd.f32 %v1385, %v1473
    %1475 = vmatmul.bf16.gmra.mxu0 %v563
    %v1476 = vpop.f32.mrf.mxu0
    %v1477 = vadd.f32 %v1388, %v1476
    %v1478 = vpop.f32.mrf.mxu0
    %v1479 = vadd.f32 %v1390, %v1478
    %1480 = vmatmul.bf16.gmra.mxu0 %v565
    %v1481 = vpop.f32.mrf.mxu0
    %v1482 = vadd.f32 %v1393, %v1481
    %v1483 = vpop.f32.mrf.mxu0
    %v1484 = vadd.f32 %v1395, %v1483
    %1485 = vdwg.mxu0
    %v1486 = vpack.c.bf16 %v1409, %v1407
    %v1487 = vpack.c.bf16 %v1414, %v1412
    %v1488 = vpack.c.bf16 %v1419, %v1417
    %v1489 = vpack.c.bf16 %v1424, %v1422
    %v1490 = vpack.c.bf16 %v1429, %v1427
    %v1491 = vpack.c.bf16 %v1434, %v1432
    %v1492 = vpack.c.bf16 %v1439, %v1437
    %v1493 = vpack.c.bf16 %v1444, %v1442
    %v1494 = vpack.c.bf16 %v1449, %v1447
    %v1495 = vpack.c.bf16 %v1454, %v1452
    %v1496 = vpack.c.bf16 %v1459, %v1457
    %v1497 = vpack.c.bf16 %v1464, %v1462
    %v1498 = vpack.c.bf16 %v1469, %v1467
    %v1499 = vpack.c.bf16 %v1474, %v1472
    %v1500 = vpack.c.bf16 %v1479, %v1477
    %v1501 = vpack.c.bf16 %v1484, %v1482
    %1502 = vmatpush.bf16.msra.mxu0 %v831
    %1503 = vmatpush.bf16.msra.mxu0 %v830
    %1504 = vmatpush.bf16.msra.mxu0 %v829
    %1505 = vmatpush.bf16.msra.mxu0 %v828
    %1506 = vmatpush.bf16.msra.mxu0 %v827
    %1507 = vmatpush.bf16.msra.mxu0 %v826
    %1508 = vmatpush.bf16.msra.mxu0 %v825
    %1509 = vmatpush.bf16.msra.mxu0 %v824
    %1510 = vmatmul.bf16.gmra.mxu0 %v1486
    %v1511 = vpop.f32.mrf.mxu0
    %v1512 = vadd.f32 %v342, %v1511
    %v1513 = vpop.f32.mrf.mxu0
    %v1514 = vadd.f32 %v343, %v1513
    %1515 = vmatmul.bf16.gmra.mxu0 %v1487
    %v1516 = vpop.f32.mrf.mxu0
    %v1517 = vadd.f32 %v344, %v1516
    %v1518 = vpop.f32.mrf.mxu0
    %v1519 = vadd.f32 %v345, %v1518
    %1520 = vmatmul.bf16.gmra.mxu0 %v1488
    %v1521 = vpop.f32.mrf.mxu0
    %v1522 = vadd.f32 %v346, %v1521
    %v1523 = vpop.f32.mrf.mxu0
    %v1524 = vadd.f32 %v347, %v1523
    %1525 = vmatmul.bf16.gmra.mxu0 %v1489
    %v1526 = vpop.f32.mrf.mxu0
    %v1527 = vadd.f32 %v348, %v1526
    %v1528 = vpop.f32.mrf.mxu0
    %v1529 = vadd.f32 %v349, %v1528
    %1530 = vmatmul.bf16.gmra.mxu0 %v1490
    %v1531 = vpop.f32.mrf.mxu0
    %v1532 = vadd.f32 %v350, %v1531
    %v1533 = vpop.f32.mrf.mxu0
    %v1534 = vadd.f32 %v351, %v1533
    %1535 = vmatmul.bf16.gmra.mxu0 %v1491
    %v1536 = vpop.f32.mrf.mxu0
    %v1537 = vadd.f32 %v352, %v1536
    %v1538 = vpop.f32.mrf.mxu0
    %v1539 = vadd.f32 %v353, %v1538
    %1540 = vmatmul.bf16.gmra.mxu0 %v1492
    %v1541 = vpop.f32.mrf.mxu0
    %v1542 = vadd.f32 %v354, %v1541
    %v1543 = vpop.f32.mrf.mxu0
    %v1544 = vadd.f32 %v355, %v1543
    %1545 = vmatmul.bf16.gmra.mxu0 %v1493
    %v1546 = vpop.f32.mrf.mxu0
    %v1547 = vadd.f32 %v356, %v1546
    %v1548 = vpop.f32.mrf.mxu0
    %v1549 = vadd.f32 %v357, %v1548
    %1550 = vmatmul.bf16.gmra.mxu0 %v1494
    %v1551 = vpop.f32.mrf.mxu0
    %v1552 = vadd.f32 %v358, %v1551
    %v1553 = vpop.f32.mrf.mxu0
    %v1554 = vadd.f32 %v359, %v1553
    %1555 = vmatmul.bf16.gmra.mxu0 %v1495
    %v1556 = vpop.f32.mrf.mxu0
    %v1557 = vadd.f32 %v360, %v1556
    %v1558 = vpop.f32.mrf.mxu0
    %v1559 = vadd.f32 %v361, %v1558
    %1560 = vmatmul.bf16.gmra.mxu0 %v1496
    %v1561 = vpop.f32.mrf.mxu0
    %v1562 = vadd.f32 %v362, %v1561
    %v1563 = vpop.f32.mrf.mxu0
    %v1564 = vadd.f32 %v363, %v1563
    %1565 = vmatmul.bf16.gmra.mxu0 %v1497
    %v1566 = vpop.f32.mrf.mxu0
    %v1567 = vadd.f32 %v364, %v1566
    %v1568 = vpop.f32.mrf.mxu0
    %v1569 = vadd.f32 %v365, %v1568
    %1570 = vmatmul.bf16.gmra.mxu0 %v1498
    %v1571 = vpop.f32.mrf.mxu0
    %v1572 = vadd.f32 %v366, %v1571
    %v1573 = vpop.f32.mrf.mxu0
    %v1574 = vadd.f32 %v367, %v1573
    %1575 = vmatmul.bf16.gmra.mxu0 %v1499
    %v1576 = vpop.f32.mrf.mxu0
    %v1577 = vadd.f32 %v368, %v1576
    %v1578 = vpop.f32.mrf.mxu0
    %v1579 = vadd.f32 %v369, %v1578
    %1580 = vmatmul.bf16.gmra.mxu0 %v1500
    %v1581 = vpop.f32.mrf.mxu0
    %v1582 = vadd.f32 %v370, %v1581
    %v1583 = vpop.f32.mrf.mxu0
    %v1584 = vadd.f32 %v371, %v1583
    %1585 = vmatmul.bf16.gmra.mxu0 %v1501
    %v1586 = vpop.f32.mrf.mxu0
    %v1587 = vadd.f32 %v372, %v1586
    %v1588 = vpop.f32.mrf.mxu0
    %v1589 = vadd.f32 %v373, %v1588
    %1590 = vdwg.mxu0
    %v1591 = vmax.f32 %v1512, 0.0
    %v1592 = vmax.f32 %v1514, 0.0
    %v1593 = vmax.f32 %v1517, 0.0
    %v1594 = vmax.f32 %v1519, 0.0
    %v1595 = vmax.f32 %v1522, 0.0
    %v1596 = vmax.f32 %v1524, 0.0
    %v1597 = vmax.f32 %v1527, 0.0
    %v1598 = vmax.f32 %v1529, 0.0
    %v1599 = vmax.f32 %v1532, 0.0
    %v1600 = vmax.f32 %v1534, 0.0
    %v1601 = vmax.f32 %v1537, 0.0
    %v1602 = vmax.f32 %v1539, 0.0
    %v1603 = vmax.f32 %v1542, 0.0
    %v1604 = vmax.f32 %v1544, 0.0
    %v1605 = vmax.f32 %v1547, 0.0
    %v1606 = vmax.f32 %v1549, 0.0
    %v1607 = vmax.f32 %v1552, 0.0
    %v1608 = vmax.f32 %v1554, 0.0
    %v1609 = vmax.f32 %v1557, 0.0
    %v1610 = vmax.f32 %v1559, 0.0
    %v1611 = vmax.f32 %v1562, 0.0
    %v1612 = vmax.f32 %v1564, 0.0
    %v1613 = vmax.f32 %v1567, 0.0
    %v1614 = vmax.f32 %v1569, 0.0
    %v1615 = vmax.f32 %v1572, 0.0
    %v1616 = vmax.f32 %v1574, 0.0
    %v1617 = vmax.f32 %v1577, 0.0
    %v1618 = vmax.f32 %v1579, 0.0
    %v1619 = vmax.f32 %v1582, 0.0
    %v1620 = vmax.f32 %v1584, 0.0
    %v1621 = vmax.f32 %v1587, 0.0
    %v1622 = vmax.f32 %v1589, 0.0
    %v1623 = vpack.c.bf16 %v1592, %v1591
    %v1624 = vpack.c.bf16 %v1594, %v1593
    %v1625 = vpack.c.bf16 %v1596, %v1595
    %v1626 = vpack.c.bf16 %v1598, %v1597
    %v1627 = vpack.c.bf16 %v1600, %v1599
    %v1628 = vpack.c.bf16 %v1602, %v1601
    %v1629 = vpack.c.bf16 %v1604, %v1603
    %v1630 = vpack.c.bf16 %v1606, %v1605
    %v1631 = vpack.c.bf16 %v1608, %v1607
    %v1632 = vpack.c.bf16 %v1610, %v1609
    %v1633 = vpack.c.bf16 %v1612, %v1611
    %v1634 = vpack.c.bf16 %v1614, %v1613
    %v1635 = vpack.c.bf16 %v1616, %v1615
    %v1636 = vpack.c.bf16 %v1618, %v1617
    %v1637 = vpack.c.bf16 %v1620, %v1619
    %v1638 = vpack.c.bf16 %v1622, %v1621
    %v1639 = vld [vmem:[%s6] sm:$0xf]
    %v1640 = vld [vmem:[%s6 + $0x4] sm:$0xf]
    %v1641 = vld [vmem:[%s6 + $0x8] sm:$0xf]
    %v1642 = vld [vmem:[%s6 + $0xc] sm:$0xf]
    %v1643 = vld [vmem:[%s6 + $0x10] sm:$0xf]
    %v1644 = vld [vmem:[%s6 + $0x14] sm:$0xf]
    %v1645 = vld [vmem:[%s6 + $0x18] sm:$0xf]
    %v1646 = vld [vmem:[%s6 + $0x1c] sm:$0xf]
    %v1647 = vld [vmem:[%s6 + $0x20] sm:$0xf]
    %v1648 = vld [vmem:[%s6 + $0x24] sm:$0xf]
    %v1649 = vld [vmem:[%s6 + $0x28] sm:$0xf]
    %v1650 = vld [vmem:[%s6 + $0x2c] sm:$0xf]
    %v1651 = vld [vmem:[%s6 + $0x30] sm:$0xf]
    %v1652 = vld [vmem:[%s6 + $0x34] sm:$0xf]
    %v1653 = vld [vmem:[%s6 + $0x38] sm:$0xf]
    %v1654 = vld [vmem:[%s6 + $0x3c] sm:$0xf]
    %v1655 = vld [vmem:[%s7] sm:$0x1]
    %v1657 = vperm.slane %v1655, 0
    %v1675 = vunpack.c.l.b16 %v1639
    %v1676 = vunpack.c.l.b16 %v1640
    %v1677 = vunpack.c.l.b16 %v1641
    %v1678 = vunpack.c.l.b16 %v1642
    %v1679 = vunpack.c.l.b16 %v1643
    %v1680 = vunpack.c.l.b16 %v1644
    %v1681 = vunpack.c.l.b16 %v1645
    %v1682 = vunpack.c.l.b16 %v1646
    %v1683 = vunpack.c.l.b16 %v1647
    %v1684 = vunpack.c.l.b16 %v1648
    %v1685 = vunpack.c.l.b16 %v1649
    %v1686 = vunpack.c.l.b16 %v1650
    %v1687 = vunpack.c.l.b16 %v1651
    %v1688 = vunpack.c.l.b16 %v1652
    %v1689 = vunpack.c.l.b16 %v1653
    %v1690 = vunpack.c.l.b16 %v1654
    %v1691 = vpack.c.b16 %v1676, %v1675
    %v1692 = vpack.c.b16 %v1678, %v1677
    %v1693 = vpack.c.b16 %v1680, %v1679
    %v1694 = vpack.c.b16 %v1682, %v1681
    %v1695 = vpack.c.b16 %v1684, %v1683
    %v1696 = vpack.c.b16 %v1686, %v1685
    %v1697 = vpack.c.b16 %v1688, %v1687
    %v1698 = vpack.c.b16 %v1690, %v1689
    %1707 = vmatpush.bf16.msra.mxu0 %v1698
    %1708 = vmatpush.bf16.msra.mxu0 %v1697
    %1709 = vmatpush.bf16.msra.mxu0 %v1696
    %1710 = vmatpush.bf16.msra.mxu0 %v1695
    %1711 = vmatpush.bf16.msra.mxu0 %v1694
    %1712 = vmatpush.bf16.msra.mxu0 %v1693
    %1713 = vmatpush.bf16.msra.mxu0 %v1692
    %1714 = vmatpush.bf16.msra.mxu0 %v1691
    %1715 = vmatmul.bf16.gmra.mxu0 %v1623
    %v1716 = vpop.f32.mrf.mxu0
    %v1717 = vadd.f32 %v1657, %v1716
    %v1718 = vpop.f32.mrf.mxu0
    %v1719 = vadd.f32 %v1657, %v1718
    %1720 = vmatmul.bf16.gmra.mxu0 %v1624
    %v1721 = vpop.f32.mrf.mxu0
    %v1722 = vadd.f32 %v1657, %v1721
    %v1723 = vpop.f32.mrf.mxu0
    %v1724 = vadd.f32 %v1657, %v1723
    %1725 = vmatmul.bf16.gmra.mxu0 %v1625
    %v1726 = vpop.f32.mrf.mxu0
    %v1727 = vadd.f32 %v1657, %v1726
    %v1728 = vpop.f32.mrf.mxu0
    %v1729 = vadd.f32 %v1657, %v1728
    %1730 = vmatmul.bf16.gmra.mxu0 %v1626
    %v1731 = vpop.f32.mrf.mxu0
    %v1732 = vadd.f32 %v1657, %v1731
    %v1733 = vpop.f32.mrf.mxu0
    %v1734 = vadd.f32 %v1657, %v1733
    %1735 = vmatmul.bf16.gmra.mxu0 %v1627
    %v1736 = vpop.f32.mrf.mxu0
    %v1737 = vadd.f32 %v1657, %v1736
    %v1738 = vpop.f32.mrf.mxu0
    %v1739 = vadd.f32 %v1657, %v1738
    %1740 = vmatmul.bf16.gmra.mxu0 %v1628
    %v1741 = vpop.f32.mrf.mxu0
    %v1742 = vadd.f32 %v1657, %v1741
    %v1743 = vpop.f32.mrf.mxu0
    %v1744 = vadd.f32 %v1657, %v1743
    %1745 = vmatmul.bf16.gmra.mxu0 %v1629
    %v1746 = vpop.f32.mrf.mxu0
    %v1747 = vadd.f32 %v1657, %v1746
    %v1748 = vpop.f32.mrf.mxu0
    %v1749 = vadd.f32 %v1657, %v1748
    %1750 = vmatmul.bf16.gmra.mxu0 %v1630
    %v1751 = vpop.f32.mrf.mxu0
    %v1752 = vadd.f32 %v1657, %v1751
    %v1753 = vpop.f32.mrf.mxu0
    %v1754 = vadd.f32 %v1657, %v1753
    %1755 = vmatmul.bf16.gmra.mxu0 %v1631
    %v1756 = vpop.f32.mrf.mxu0
    %v1757 = vadd.f32 %v1657, %v1756
    %v1758 = vpop.f32.mrf.mxu0
    %v1759 = vadd.f32 %v1657, %v1758
    %1760 = vmatmul.bf16.gmra.mxu0 %v1632
    %v1761 = vpop.f32.mrf.mxu0
    %v1762 = vadd.f32 %v1657, %v1761
    %v1763 = vpop.f32.mrf.mxu0
    %v1764 = vadd.f32 %v1657, %v1763
    %1765 = vmatmul.bf16.gmra.mxu0 %v1633
    %v1766 = vpop.f32.mrf.mxu0
    %v1767 = vadd.f32 %v1657, %v1766
    %v1768 = vpop.f32.mrf.mxu0
    %v1769 = vadd.f32 %v1657, %v1768
    %1770 = vmatmul.bf16.gmra.mxu0 %v1634
    %v1771 = vpop.f32.mrf.mxu0
    %v1772 = vadd.f32 %v1657, %v1771
    %v1773 = vpop.f32.mrf.mxu0
    %v1774 = vadd.f32 %v1657, %v1773
    %1775 = vmatmul.bf16.gmra.mxu0 %v1635
    %v1776 = vpop.f32.mrf.mxu0
    %v1777 = vadd.f32 %v1657, %v1776
    %v1778 = vpop.f32.mrf.mxu0
    %v1779 = vadd.f32 %v1657, %v1778
    %1780 = vmatmul.bf16.gmra.mxu0 %v1636
    %v1781 = vpop.f32.mrf.mxu0
    %v1782 = vadd.f32 %v1657, %v1781
    %v1783 = vpop.f32.mrf.mxu0
    %v1784 = vadd.f32 %v1657, %v1783
    %1785 = vmatmul.bf16.gmra.mxu0 %v1637
    %v1786 = vpop.f32.mrf.mxu0
    %v1787 = vadd.f32 %v1657, %v1786
    %v1788 = vpop.f32.mrf.mxu0
    %v1789 = vadd.f32 %v1657, %v1788
    %1790 = vmatmul.bf16.gmra.mxu0 %v1638
    %v1791 = vpop.f32.mrf.mxu0
    %v1792 = vadd.f32 %v1657, %v1791
    %v1793 = vpop.f32.mrf.mxu0
    %v1794 = vadd.f32 %v1657, %v1793
    %1795 = vdwg.mxu0
    %v1796 = vmax.f32 %v1717, 0.0
    %v1797 = vmax.f32 %v1719, 0.0
    %v1798 = vmax.f32 %v1722, 0.0
    %v1799 = vmax.f32 %v1724, 0.0
    %v1800 = vmax.f32 %v1727, 0.0
    %v1801 = vmax.f32 %v1729, 0.0
    %v1802 = vmax.f32 %v1732, 0.0
    %v1803 = vmax.f32 %v1734, 0.0
    %v1804 = vmax.f32 %v1737, 0.0
    %v1805 = vmax.f32 %v1739, 0.0
    %v1806 = vmax.f32 %v1742, 0.0
    %v1807 = vmax.f32 %v1744, 0.0
    %v1808 = vmax.f32 %v1747, 0.0
    %v1809 = vmax.f32 %v1749, 0.0
    %v1810 = vmax.f32 %v1752, 0.0
    %v1811 = vmax.f32 %v1754, 0.0
    %v1812 = vmax.f32 %v1757, 0.0
    %v1813 = vmax.f32 %v1759, 0.0
    %v1814 = vmax.f32 %v1762, 0.0
    %v1815 = vmax.f32 %v1764, 0.0
    %v1816 = vmax.f32 %v1767, 0.0
    %v1817 = vmax.f32 %v1769, 0.0
    %v1818 = vmax.f32 %v1772, 0.0
    %v1819 = vmax.f32 %v1774, 0.0
    %v1820 = vmax.f32 %v1777, 0.0
    %v1821 = vmax.f32 %v1779, 0.0
    %v1822 = vmax.f32 %v1782, 0.0
    %v1823 = vmax.f32 %v1784, 0.0
    %v1824 = vmax.f32 %v1787, 0.0
    %v1825 = vmax.f32 %v1789, 0.0
    %v1826 = vmax.f32 %v1792, 0.0
    %v1827 = vmax.f32 %v1794, 0.0
    %v1828 = vrot.slane %v1796, 4
    %v1829 = vadd.f32 %v1796, %v1828
    %v1830 = vrot.slane %v1829, 2
    %v1831 = vadd.f32 %v1829, %v1830
    %v1832 = vrot.slane %v1831, 1
    %v1833 = vadd.f32 %v1831, %v1832
    %v1834 = vrot.slane %v1797, 4
    %v1835 = vadd.f32 %v1797, %v1834
    %v1836 = vrot.slane %v1835, 2
    %v1837 = vadd.f32 %v1835, %v1836
    %v1838 = vrot.slane %v1837, 1
    %v1839 = vadd.f32 %v1837, %v1838
    %v1840 = vrot.slane %v1798, 4
    %v1841 = vadd.f32 %v1798, %v1840
    %v1842 = vrot.slane %v1841, 2
    %v1843 = vadd.f32 %v1841, %v1842
    %v1844 = vrot.slane %v1843, 1
    %v1845 = vadd.f32 %v1843, %v1844
    %v1846 = vrot.slane %v1799, 4
    %v1847 = vadd.f32 %v1799, %v1846
    %v1848 = vrot.slane %v1847, 2
    %v1849 = vadd.f32 %v1847, %v1848
    %v1850 = vrot.slane %v1849, 1
    %v1851 = vadd.f32 %v1849, %v1850
    %v1852 = vrot.slane %v1800, 4
    %v1853 = vadd.f32 %v1800, %v1852
    %v1854 = vrot.slane %v1853, 2
    %v1855 = vadd.f32 %v1853, %v1854
    %v1856 = vrot.slane %v1855, 1
    %v1857 = vadd.f32 %v1855, %v1856
    %v1858 = vrot.slane %v1801, 4
    %v1859 = vadd.f32 %v1801, %v1858
    %v1860 = vrot.slane %v1859, 2
    %v1861 = vadd.f32 %v1859, %v1860
    %v1862 = vrot.slane %v1861, 1
    %v1863 = vadd.f32 %v1861, %v1862
    %v1864 = vrot.slane %v1802, 4
    %v1865 = vadd.f32 %v1802, %v1864
    %v1866 = vrot.slane %v1865, 2
    %v1867 = vadd.f32 %v1865, %v1866
    %v1868 = vrot.slane %v1867, 1
    %v1869 = vadd.f32 %v1867, %v1868
    %v1870 = vrot.slane %v1803, 4
    %v1871 = vadd.f32 %v1803, %v1870
    %v1872 = vrot.slane %v1871, 2
    %v1873 = vadd.f32 %v1871, %v1872
    %v1874 = vrot.slane %v1873, 1
    %v1875 = vadd.f32 %v1873, %v1874
    %v1876 = vrot.slane %v1804, 4
    %v1877 = vadd.f32 %v1804, %v1876
    %v1878 = vrot.slane %v1877, 2
    %v1879 = vadd.f32 %v1877, %v1878
    %v1880 = vrot.slane %v1879, 1
    %v1881 = vadd.f32 %v1879, %v1880
    %v1882 = vrot.slane %v1805, 4
    %v1883 = vadd.f32 %v1805, %v1882
    %v1884 = vrot.slane %v1883, 2
    %v1885 = vadd.f32 %v1883, %v1884
    %v1886 = vrot.slane %v1885, 1
    %v1887 = vadd.f32 %v1885, %v1886
    %v1888 = vrot.slane %v1806, 4
    %v1889 = vadd.f32 %v1806, %v1888
    %v1890 = vrot.slane %v1889, 2
    %v1891 = vadd.f32 %v1889, %v1890
    %v1892 = vrot.slane %v1891, 1
    %v1893 = vadd.f32 %v1891, %v1892
    %v1894 = vrot.slane %v1807, 4
    %v1895 = vadd.f32 %v1807, %v1894
    %v1896 = vrot.slane %v1895, 2
    %v1897 = vadd.f32 %v1895, %v1896
    %v1898 = vrot.slane %v1897, 1
    %v1899 = vadd.f32 %v1897, %v1898
    %v1900 = vrot.slane %v1808, 4
    %v1901 = vadd.f32 %v1808, %v1900
    %v1902 = vrot.slane %v1901, 2
    %v1903 = vadd.f32 %v1901, %v1902
    %v1904 = vrot.slane %v1903, 1
    %v1905 = vadd.f32 %v1903, %v1904
    %v1906 = vrot.slane %v1809, 4
    %v1907 = vadd.f32 %v1809, %v1906
    %v1908 = vrot.slane %v1907, 2
    %v1909 = vadd.f32 %v1907, %v1908
    %v1910 = vrot.slane %v1909, 1
    %v1911 = vadd.f32 %v1909, %v1910
    %v1912 = vrot.slane %v1810, 4
    %v1913 = vadd.f32 %v1810, %v1912
    %v1914 = vrot.slane %v1913, 2
    %v1915 = vadd.f32 %v1913, %v1914
    %v1916 = vrot.slane %v1915, 1
    %v1917 = vadd.f32 %v1915, %v1916
    %v1918 = vrot.slane %v1811, 4
    %v1919 = vadd.f32 %v1811, %v1918
    %v1920 = vrot.slane %v1919, 2
    %v1921 = vadd.f32 %v1919, %v1920
    %v1922 = vrot.slane %v1921, 1
    %v1923 = vadd.f32 %v1921, %v1922
    %v1924 = vrot.slane %v1812, 4
    %v1925 = vadd.f32 %v1812, %v1924
    %v1926 = vrot.slane %v1925, 2
    %v1927 = vadd.f32 %v1925, %v1926
    %v1928 = vrot.slane %v1927, 1
    %v1929 = vadd.f32 %v1927, %v1928
    %v1930 = vrot.slane %v1813, 4
    %v1931 = vadd.f32 %v1813, %v1930
    %v1932 = vrot.slane %v1931, 2
    %v1933 = vadd.f32 %v1931, %v1932
    %v1934 = vrot.slane %v1933, 1
    %v1935 = vadd.f32 %v1933, %v1934
    %v1936 = vrot.slane %v1814, 4
    %v1937 = vadd.f32 %v1814, %v1936
    %v1938 = vrot.slane %v1937, 2
    %v1939 = vadd.f32 %v1937, %v1938
    %v1940 = vrot.slane %v1939, 1
    %v1941 = vadd.f32 %v1939, %v1940
    %v1942 = vrot.slane %v1815, 4
    %v1943 = vadd.f32 %v1815, %v1942
    %v1944 = vrot.slane %v1943, 2
    %v1945 = vadd.f32 %v1943, %v1944
    %v1946 = vrot.slane %v1945, 1
    %v1947 = vadd.f32 %v1945, %v1946
    %v1948 = vrot.slane %v1816, 4
    %v1949 = vadd.f32 %v1816, %v1948
    %v1950 = vrot.slane %v1949, 2
    %v1951 = vadd.f32 %v1949, %v1950
    %v1952 = vrot.slane %v1951, 1
    %v1953 = vadd.f32 %v1951, %v1952
    %v1954 = vrot.slane %v1817, 4
    %v1955 = vadd.f32 %v1817, %v1954
    %v1956 = vrot.slane %v1955, 2
    %v1957 = vadd.f32 %v1955, %v1956
    %v1958 = vrot.slane %v1957, 1
    %v1959 = vadd.f32 %v1957, %v1958
    %v1960 = vrot.slane %v1818, 4
    %v1961 = vadd.f32 %v1818, %v1960
    %v1962 = vrot.slane %v1961, 2
    %v1963 = vadd.f32 %v1961, %v1962
    %v1964 = vrot.slane %v1963, 1
    %v1965 = vadd.f32 %v1963, %v1964
    %v1966 = vrot.slane %v1819, 4
    %v1967 = vadd.f32 %v1819, %v1966
    %v1968 = vrot.slane %v1967, 2
    %v1969 = vadd.f32 %v1967, %v1968
    %v1970 = vrot.slane %v1969, 1
    %v1971 = vadd.f32 %v1969, %v1970
    %v1972 = vrot.slane %v1820, 4
    %v1973 = vadd.f32 %v1820, %v1972
    %v1974 = vrot.slane %v1973, 2
    %v1975 = vadd.f32 %v1973, %v1974
    %v1976 = vrot.slane %v1975, 1
    %v1977 = vadd.f32 %v1975, %v1976
    %v1978 = vrot.slane %v1821, 4
    %v1979 = vadd.f32 %v1821, %v1978
    %v1980 = vrot.slane %v1979, 2
    %v1981 = vadd.f32 %v1979, %v1980
    %v1982 = vrot.slane %v1981, 1
    %v1983 = vadd.f32 %v1981, %v1982
    %v1984 = vrot.slane %v1822, 4
    %v1985 = vadd.f32 %v1822, %v1984
    %v1986 = vrot.slane %v1985, 2
    %v1987 = vadd.f32 %v1985, %v1986
    %v1988 = vrot.slane %v1987, 1
    %v1989 = vadd.f32 %v1987, %v1988
    %v1990 = vrot.slane %v1823, 4
    %v1991 = vadd.f32 %v1823, %v1990
    %v1992 = vrot.slane %v1991, 2
    %v1993 = vadd.f32 %v1991, %v1992
    %v1994 = vrot.slane %v1993, 1
    %v1995 = vadd.f32 %v1993, %v1994
    %v1996 = vrot.slane %v1824, 4
    %v1997 = vadd.f32 %v1824, %v1996
    %v1998 = vrot.slane %v1997, 2
    %v1999 = vadd.f32 %v1997, %v1998
    %v2000 = vrot.slane %v1999, 1
    %v2001 = vadd.f32 %v1999, %v2000
    %v2002 = vrot.slane %v1825, 4
    %v2003 = vadd.f32 %v1825, %v2002
    %v2004 = vrot.slane %v2003, 2
    %v2005 = vadd.f32 %v2003, %v2004
    %v2006 = vrot.slane %v2005, 1
    %v2007 = vadd.f32 %v2005, %v2006
    %v2008 = vrot.slane %v1826, 4
    %v2009 = vadd.f32 %v1826, %v2008
    %v2010 = vrot.slane %v2009, 2
    %v2011 = vadd.f32 %v2009, %v2010
    %v2012 = vrot.slane %v2011, 1
    %v2013 = vadd.f32 %v2011, %v2012
    %v2014 = vrot.slane %v1827, 4
    %v2015 = vadd.f32 %v1827, %v2014
    %v2016 = vrot.slane %v2015, 2
    %v2017 = vadd.f32 %v2015, %v2016
    %v2018 = vrot.slane %v2017, 1
    %v2019 = vadd.f32 %v2017, %v2018
    %vm2052 = vcmask 1041409
    %v2053 = vsel %vm2052, %v1839, %v1833
    %vm2054 = vcmask 1042434
    %v2055 = vsel %vm2054, %v1845, %v2053
    %vm2056 = vcmask 1043459
    %v2057 = vsel %vm2056, %v1851, %v2055
    %vm2058 = vcmask 1044484
    %v2059 = vsel %vm2058, %v1857, %v2057
    %vm2060 = vcmask 1045509
    %v2061 = vsel %vm2060, %v1863, %v2059
    %vm2062 = vcmask 1046534
    %v2063 = vsel %vm2062, %v1869, %v2061
    %vm2064 = vcmask 1047559
    %v2065 = vsel %vm2064, %v1875, %v2063
    %v2066 = vsel %vm2052, %v1887, %v1881
    %v2067 = vsel %vm2054, %v1893, %v2066
    %v2068 = vsel %vm2056, %v1899, %v2067
    %v2069 = vsel %vm2058, %v1905, %v2068
    %v2070 = vsel %vm2060, %v1911, %v2069
    %v2071 = vsel %vm2062, %v1917, %v2070
    %v2072 = vsel %vm2064, %v1923, %v2071
    %v2073 = vsel %vm2052, %v1935, %v1929
    %v2074 = vsel %vm2054, %v1941, %v2073
    %v2075 = vsel %vm2056, %v1947, %v2074
    %v2076 = vsel %vm2058, %v1953, %v2075
    %v2077 = vsel %vm2060, %v1959, %v2076
    %v2078 = vsel %vm2062, %v1965, %v2077
    %v2079 = vsel %vm2064, %v1971, %v2078
    %v2080 = vsel %vm2052, %v1983, %v1977
    %v2081 = vsel %vm2054, %v1989, %v2080
    %v2082 = vsel %vm2056, %v1995, %v2081
    %v2083 = vsel %vm2058, %v2001, %v2082
    %v2084 = vsel %vm2060, %v2007, %v2083
    %v2085 = vsel %vm2062, %v2013, %v2084
    %v2086 = vsel %vm2064, %v2019, %v2085
    %2091 = vst [vmem:[#allocation5] sm:$0xff] %v2065
    %2092 = vst [vmem:[#allocation5 + $0x8] sm:$0xff] %v2072
    %2093 = vst [vmem:[#allocation5 + $0x10] sm:$0xff] %v2079
    %2094 = vst [vmem:[#allocation5 + $0x18] sm:$0xff] %v2086
    // Predicated region
    $region38: #{tpu_custom_call.1} parent=1 // pred_check
      _
    $region39: #{tpu_custom_call.1} parent=1 // pred_check_branch
      %2096 = sbr.rel (0) target = $region41
    $region40: #{tpu_custom_call.1} parent=1 // pred_region
      %2098 = vsyncadd [#allocation4], 0
      %s2099 = sshll.u32 [#allocation5], 4
      %s2100 = int_to_ptr.vmem [resolvable:$true] %s2099
      %s2101 = sshll.u32 %s8, 4
      %s2102 = int_to_ptr.hbm [resolvable:$true] %s2101
      %2107 = dma.vmem_to_hbm [thread:$0]  %s2100, 512, %s2102, [#allocation4], 128, 128, 8
    $region41: #{tpu_custom_call.1} parent=1 // pred_fallthru
      _
    // Predicated region
    $region42: #{tpu_custom_call.1} parent=1 // pred_check
      _
    $region43: #{tpu_custom_call.1} parent=1 // pred_check_branch
      %2109 = sbr.rel (0) target = $region45
    $region44: #{tpu_custom_call.1} parent=1 // pred_region
      %2111 = dma.done [#allocation4], 512
    $region45: #{tpu_custom_call.1} parent=1 // pred_fallthru
      _
    %2112 = vsyncpa [#allocation3], 1
    %2113 = vsyncpa [#allocation4], 1

</llo_original>
